<compile_context>
chip_gen: v7x
topology: tpu7x:2x2x1
jax: 0.10.0
libtpu: 0.0.40
codegen_flags: <defaults>
</compile_context>

<pallas_src>
import functools

import jax
import jax.numpy as jnp
import numpy as np
from jax.experimental import pallas as pl
from jax.experimental.pallas import tpu as pltpu

_EPS = 1e-5     # nn.InstanceNorm1d default eps
_LEAK = 0.1     # nn.LeakyReLU negative slope


def _moving_avg_matrix(T, kernel_size):
    """(T, T) matrix A such that A @ x == replicate-padded AvgPool1d(K, stride=1)(x)."""
    p = (kernel_size - 1) // 2
    a = np.zeros((T, T), np.float32)
    for t in range(T):
        for d in range(kernel_size):
            u = min(max(t + d - p, 0), T - 1)
            a[t, u] += 1.0 / kernel_size
    return a


def _leaky(v):
    return jnp.maximum(v, _LEAK * v)


def _extrema_v2_kernel(T, H, x_ref, q_ref, wp_ref, bp_ref, o_ref):
    # x_ref : (T*C, Bt)   batch-last input slab (rows ordered (t, c), batch on lanes)
    # q_ref : (2*T*H, T*C) folded [(I-A)xWs ; AxWt] operator (rows ordered (branch, t, h))
    # wp_ref: (O, T*H)     predictor weight, columns ordered (t, h)
    # bp_ref: (O, 1)       predictor bias
    # o_ref : (O, Bt)      lane-dense output slab
    x = x_ref[...]

    # Decomposition + both channel encoders as ONE MXU matmul (K=T*C, M=2*T*H, N=Bt).
    pre = jnp.dot(q_ref[...], x, preferred_element_type=jnp.float32)      # (2*T*H, Bt)

    def branch(p):
        # p: (T*H, Bt), rows (t, h).  Reshape splits only the leading axis (H is a
        # multiple of 8 for the intended configs, so sublane tiles stay aligned).
        v = p.reshape(T, H, p.shape[-1])                                  # (T, H, Bt)
        mu = jnp.mean(v, axis=0, keepdims=True)                           # VPU slab adds
        d = v - mu
        var = jnp.mean(d * d, axis=0, keepdims=True)
        # rsqrt on the tiny (1, H, Bt) stats -> EUP slot; avoids a full-size divide.
        y = d * jax.lax.rsqrt(var + _EPS)
        return _leaky(y)                                                  # LeakyReLU 0.1

    z = _leaky(branch(pre[: T * H]) + branch(pre[T * H:]))                # (T, H, Bt)
    z = z.reshape(T * H, z.shape[-1])                                     # (T*H, Bt)

    # Predictor Linear(H*T -> O): single MXU matmul, lane-dense (O, Bt) store.
    o_ref[...] = (jnp.dot(wp_ref[...], z, preferred_element_type=jnp.float32)
                  + bp_ref[...])


def extrema_detector_v2(candle_inputs, w_seasonal, b_seasonal, w_trend, b_trend,
                        w_pred, b_pred, *, kernel_size, batch_block=256):
    """ExtremaDetectorV2 forward (eval mode).

    candle_inputs: (B, T, C) -- (batch, input_lookback_num, input_ch)
    w_seasonal/w_trend: (H, C), b_seasonal/b_trend: (H,)   [torch nn.Linear layout]
    w_pred: (O, H*T), b_pred: (O,)
    """
    # Encoder biases are cancelled exactly by the affine-free InstanceNorm1d over time.
    del b_seasonal, b_trend
    assert kernel_size % 2 == 1, (
        "replicate-padded moving average only matches AvgPool1d for odd kernel_size")

    x = candle_inputs.astype(jnp.float32)
    B, T, C = x.shape
    H = w_seasonal.shape[0]
    O = w_pred.shape[0]

    # ---------- offline weight folding (plain JAX, outside the kernel) ----------
    a_mat = jnp.asarray(_moving_avg_matrix(T, kernel_size))               # (T, T)
    i_m_a = jnp.eye(T, dtype=jnp.float32) - a_mat                         # residue operator
    ws = jnp.asarray(w_seasonal, jnp.float32)                             # (H, C)
    wt = jnp.asarray(w_trend, jnp.float32)
    # Time-mixing (A) and channel-mixing (W) commute, so fold them into one operator:
    #   pre[(branch, t, h), b] = sum_{t', c} Q[(branch,t,h),(t',c)] * x[b, t', c]
    q = jnp.concatenate([
        jnp.einsum('tu,hc->thuc', i_m_a, ws).reshape(T * H, T * C),       # seasonal branch
        jnp.einsum('tu,hc->thuc', a_mat, wt).reshape(T * H, T * C),       # trend branch
    ], axis=0)                                                            # (2*T*H, T*C)
    # torch flattens a (B, H, T) tensor, so W[o, h*T + t] -> wp[o, (t, h)].
    wp = (jnp.asarray(w_pred, jnp.float32)
          .reshape(O, H, T).transpose(0, 2, 1).reshape(O, T * H))         # (O, T*H)
    bp = jnp.asarray(b_pred, jnp.float32).reshape(O, 1)                   # (O, 1)

    # Batch-last layout for the kernel: rows = (t, c), lanes = batch.
    x_flat = x.reshape(B, T * C).T                                        # (T*C, B)

    Bt = min(B, batch_block)
    grid = (pl.cdiv(B, Bt),)
    kern = functools.partial(_extrema_v2_kernel, T, H)

    out = pl.pallas_call(
        kern,
        out_shape=jax.ShapeDtypeStruct((O, B), jnp.float32),
        grid_spec=pltpu.PrefetchScalarGridSpec(
            num_scalar_prefetch=0,
            grid=grid,
            in_specs=[
                pl.BlockSpec((T * C, Bt), lambda i: (0, i)),        # input slab (lanes=batch)
                pl.BlockSpec((2 * T * H, T * C), lambda i: (0, 0)), # folded operator Q
                pl.BlockSpec((O, T * H), lambda i: (0, 0)),         # predictor weight
                pl.BlockSpec((O, 1), lambda i: (0, 0)),             # predictor bias
            ],
            out_specs=pl.BlockSpec((O, Bt), lambda i: (0, i)),
        ),
        compiler_params=pltpu.CompilerParams(
            dimension_semantics=("parallel",),        # batch slabs may split across TCs
            vmem_limit_bytes=32 * 1024 * 1024),
    )(x_flat, q, wp, bp)

    out = out.T                                                           # (B, O)
    if O == 1:                                                            # mirror .squeeze(-1)
        return out[:, 0]
    return out


def reference(x, w_s, b_s, w_t, b_t, w_p, b_p, kernel_size):
    """Pure-JAX mirror of the PyTorch ExtremaDetectorV2 forward (eval mode)."""
    B, T, C = x.shape
    O = w_p.shape[0]
    p = (kernel_size - 1) // 2
    hp = jax.lax.Precision.HIGHEST

    front = jnp.repeat(x[:, :1, :], p, axis=1)
    end = jnp.repeat(x[:, -1:, :], p, axis=1)
    xp = jnp.concatenate([front, x, end], axis=1)                         # (B, T+2p, C)
    mean = jnp.mean(jnp.stack([xp[:, j:j + T, :] for j in range(kernel_size)], 0), 0)
    residue = x - mean

    def linear_norm_lrelu(v, w, b):             # v: (B, T, C); torch LinearBatchRelu
        y = jnp.einsum('btc,hc->bth', v, w, precision=hp) + b             # (B, T, H)
        y = jnp.swapaxes(y, 1, 2)                                         # (B, H, T)
        mu = jnp.mean(y, axis=2, keepdims=True)
        var = jnp.mean((y - mu) ** 2, axis=2, keepdims=True)
        y = (y - mu) / jnp.sqrt(var + _EPS)
        return jnp.where(y >= 0, y, _LEAK * y)

    out = linear_norm_lrelu(residue, w_s, b_s) + linear_norm_lrelu(mean, w_t, b_t)  # (B,H,T)
    flat = out.reshape(B, -1)                                             # (B, H*T), f = h*T+t
    flat = jnp.where(flat >= 0, flat, _LEAK * flat)
    pred = jnp.einsum('bf,of->bo', flat, w_p, precision=hp) + b_p[None, :]
    if O == 1:
        pred = pred[:, 0]
    return pred


if __name__ == "__main__":
    # Module hyper-parameters (small, deterministic).
    C_IN = 4     # input_ch
    H = 32       # hidden_dim
    O = 3        # output_num
    T = 16       # input_lookback_num
    K = 5        # moving_avg_kernel_size (must be odd)

    key = jax.random.PRNGKey(0)
    kx, kws, kbs, kwt, kbt, kwp, kbp, kx2 = jax.random.split(key, 8)

    w_seasonal = jax.random.normal(kws, (H, C_IN), jnp.float32) * 0.3     # torch (out, in)
    b_seasonal = jax.random.uniform(kbs, (H,), jnp.float32, -0.1, 0.1)
    w_trend = jax.random.normal(kwt, (H, C_IN), jnp.float32) * 0.3
    b_trend = jax.random.uniform(kbt, (H,), jnp.float32, -0.1, 0.1)
    w_pred = jax.random.normal(kwp, (O, H * T), jnp.float32) * 0.05       # torch (out, in)
    b_pred = jax.random.uniform(kbp, (O,), jnp.float32, -0.1, 0.1)

    # --- small functional check (single grid step, whole batch in one slab) ---
    B = 8
    x = jax.random.normal(kx, (B, T, C_IN), dtype=jnp.float32)            # (batch, time, ch)
    pred = extrema_detector_v2(x, w_seasonal, b_seasonal, w_trend, b_trend,
                               w_pred, b_pred, kernel_size=K)
    pred = jax.block_until_ready(pred)
    ref = reference(x, w_seasonal, b_seasonal, w_trend, b_trend, w_pred, b_pred, K)
    # Tolerance budgets for MXU f32 multi-pass matmul behavior vs the HIGHEST-precision
    # XLA reference (amplified slightly by the instance-norm rescaling).
    np.testing.assert_allclose(np.asarray(pred), np.asarray(ref), rtol=2e-3, atol=2e-3)

    # --- multi-slab, lane-dense check (grid = 3 batch slabs of 128 lanes each) ---
    B2 = 384
    x2 = jax.random.normal(kx2, (B2, T, C_IN), dtype=jnp.float32)
    pred2 = extrema_detector_v2(x2, w_seasonal, b_seasonal, w_trend, b_trend,
                                w_pred, b_pred, kernel_size=K, batch_block=128)
    pred2 = jax.block_until_ready(pred2)
    ref2 = reference(x2, w_seasonal, b_seasonal, w_trend, b_trend, w_pred, b_pred, K)
    np.testing.assert_allclose(np.asarray(pred2), np.asarray(ref2), rtol=2e-3, atol=2e-3)

    print("KERNEL_OK")
</pallas_src>

<mosaic_0001>
module attributes {stable_mosaic.version = 11 : i64} {
  func.func @_extrema_v2_kernel(%arg0: i32, %arg1: memref<64x8xf32, #tpu.memory_space<vmem>>, %arg2: memref<1024x64xf32, #tpu.memory_space<vmem>>, %arg3: memref<3x512xf32, #tpu.memory_space<vmem>>, %arg4: memref<3x1xf32, #tpu.memory_space<vmem>>, %arg5: memref<3x8xf32, #tpu.memory_space<vmem>>) attributes {dimension_semantics = [#tpu.dimension_semantics<parallel>], iteration_bounds = array<i64: 1>, scalar_prefetch = 0 : i64, scratch_operands = 0 : i64, tpu.core_type = #tpu.core_type<tc>, window_params = [{transform_indices = @transform_0, window_bounds = array<i64: 64, 8>}, {pipeline_mode = #tpu.pipeline_mode<synchronous>, transform_indices = @transform_1, window_bounds = array<i64: 1024, 64>}, {pipeline_mode = #tpu.pipeline_mode<synchronous>, transform_indices = @transform_2, window_bounds = array<i64: 3, 512>}, {pipeline_mode = #tpu.pipeline_mode<synchronous>, transform_indices = @transform_3, window_bounds = array<i64: 3, 1>}, {transform_indices = @transform_4, window_bounds = array<i64: 3, 8>}]} {
    %c0 = arith.constant 0 : index
    %c0_0 = arith.constant 0 : index
    %0 = vector.load %arg1[%c0, %c0_0] : memref<64x8xf32, #tpu.memory_space<vmem>>, vector<64x8xf32>
    %c0_1 = arith.constant 0 : index
    %c0_2 = arith.constant 0 : index
    %1 = vector.load %arg2[%c0_1, %c0_2] : memref<1024x64xf32, #tpu.memory_space<vmem>>, vector<1024x64xf32>
    %cst = arith.constant dense<0.000000e+00> : vector<1024x8xf32>
    %2 = tpu.matmul %1, %0, %cst {dimension_numbers = #tpu.dot_dimension_numbers<[1], [0], [0], [1], [0, 0, 1, 1], [], []>} : vector<1024x64xf32>, vector<64x8xf32>, vector<1024x8xf32> -> vector<1024x8xf32>
    %3 = vector.extract_strided_slice %2 {offsets = [0, 0], sizes = [512, 8], strides = [1, 1]} : vector<1024x8xf32> to vector<512x8xf32>
    %4 = vector.shape_cast %3 : vector<512x8xf32> to vector<16x32x8xf32>
    %cst_3 = arith.constant dense<0.000000e+00> : vector<32x8xf32>
    %5 = vector.multi_reduction <add>, %4, %cst_3 [0] : vector<16x32x8xf32> to vector<32x8xf32>
    %6 = vector.shape_cast %5 : vector<32x8xf32> to vector<1x32x8xf32>
    %cst_4 = arith.constant 1.600000e+01 : f32
    %7 = vector.broadcast %cst_4 : f32 to vector<1x32x8xf32>
    %8 = arith.divf %6, %7 : vector<1x32x8xf32>
    %9 = vector.broadcast %8 : vector<1x32x8xf32> to vector<16x32x8xf32>
    %10 = arith.subf %4, %9 : vector<16x32x8xf32>
    %11 = arith.mulf %10, %10 : vector<16x32x8xf32>
    %cst_5 = arith.constant dense<0.000000e+00> : vector<32x8xf32>
    %12 = vector.multi_reduction <add>, %11, %cst_5 [0] : vector<16x32x8xf32> to vector<32x8xf32>
    %13 = vector.shape_cast %12 : vector<32x8xf32> to vector<1x32x8xf32>
    %cst_6 = arith.constant 1.600000e+01 : f32
    %14 = vector.broadcast %cst_6 : f32 to vector<1x32x8xf32>
    %15 = arith.divf %13, %14 : vector<1x32x8xf32>
    %cst_7 = arith.constant 9.99999974E-6 : f32
    %16 = vector.broadcast %cst_7 : f32 to vector<1x32x8xf32>
    %17 = arith.addf %15, %16 : vector<1x32x8xf32>
    %18 = math.rsqrt %17 : vector<1x32x8xf32>
    %19 = vector.broadcast %18 : vector<1x32x8xf32> to vector<16x32x8xf32>
    %20 = arith.mulf %10, %19 : vector<16x32x8xf32>
    %cst_8 = arith.constant 1.000000e-01 : f32
    %21 = vector.broadcast %cst_8 : f32 to vector<16x32x8xf32>
    %22 = arith.mulf %21, %20 : vector<16x32x8xf32>
    %23 = arith.maximumf %20, %22 : vector<16x32x8xf32>
    %24 = vector.extract_strided_slice %2 {offsets = [512, 0], sizes = [512, 8], strides = [1, 1]} : vector<1024x8xf32> to vector<512x8xf32>
    %25 = vector.shape_cast %24 : vector<512x8xf32> to vector<16x32x8xf32>
    %cst_9 = arith.constant dense<0.000000e+00> : vector<32x8xf32>
    %26 = vector.multi_reduction <add>, %25, %cst_9 [0] : vector<16x32x8xf32> to vector<32x8xf32>
    %27 = vector.shape_cast %26 : vector<32x8xf32> to vector<1x32x8xf32>
    %cst_10 = arith.constant 1.600000e+01 : f32
    %28 = vector.broadcast %cst_10 : f32 to vector<1x32x8xf32>
    %29 = arith.divf %27, %28 : vector<1x32x8xf32>
    %30 = vector.broadcast %29 : vector<1x32x8xf32> to vector<16x32x8xf32>
    %31 = arith.subf %25, %30 : vector<16x32x8xf32>
    %32 = arith.mulf %31, %31 : vector<16x32x8xf32>
    %cst_11 = arith.constant dense<0.000000e+00> : vector<32x8xf32>
    %33 = vector.multi_reduction <add>, %32, %cst_11 [0] : vector<16x32x8xf32> to vector<32x8xf32>
    %34 = vector.shape_cast %33 : vector<32x8xf32> to vector<1x32x8xf32>
    %cst_12 = arith.constant 1.600000e+01 : f32
    %35 = vector.broadcast %cst_12 : f32 to vector<1x32x8xf32>
    %36 = arith.divf %34, %35 : vector<1x32x8xf32>
    %cst_13 = arith.constant 9.99999974E-6 : f32
    %37 = vector.broadcast %cst_13 : f32 to vector<1x32x8xf32>
    %38 = arith.addf %36, %37 : vector<1x32x8xf32>
    %39 = math.rsqrt %38 : vector<1x32x8xf32>
    %40 = vector.broadcast %39 : vector<1x32x8xf32> to vector<16x32x8xf32>
    %41 = arith.mulf %31, %40 : vector<16x32x8xf32>
    %cst_14 = arith.constant 1.000000e-01 : f32
    %42 = vector.broadcast %cst_14 : f32 to vector<16x32x8xf32>
    %43 = arith.mulf %42, %41 : vector<16x32x8xf32>
    %44 = arith.maximumf %41, %43 : vector<16x32x8xf32>
    %45 = arith.addf %23, %44 : vector<16x32x8xf32>
    %cst_15 = arith.constant 1.000000e-01 : f32
    %46 = vector.broadcast %cst_15 : f32 to vector<16x32x8xf32>
    %47 = arith.mulf %46, %45 : vector<16x32x8xf32>
    %48 = arith.maximumf %45, %47 : vector<16x32x8xf32>
    %49 = vector.shape_cast %48 : vector<16x32x8xf32> to vector<512x8xf32>
    %c0_16 = arith.constant 0 : index
    %c0_17 = arith.constant 0 : index
    %50 = vector.load %arg3[%c0_16, %c0_17] : memref<3x512xf32, #tpu.memory_space<vmem>>, vector<3x512xf32>
    %cst_18 = arith.constant dense<0.000000e+00> : vector<3x8xf32>
    %51 = tpu.matmul %50, %49, %cst_18 {dimension_numbers = #tpu.dot_dimension_numbers<[1], [0], [0], [1], [0, 0, 1, 1], [], []>} : vector<3x512xf32>, vector<512x8xf32>, vector<3x8xf32> -> vector<3x8xf32>
    %c0_19 = arith.constant 0 : index
    %c0_20 = arith.constant 0 : index
    %52 = vector.load %arg4[%c0_19, %c0_20] : memref<3x1xf32, #tpu.memory_space<vmem>>, vector<3x1xf32>
    %53 = vector.broadcast %52 : vector<3x1xf32> to vector<3x8xf32>
    %54 = arith.addf %51, %53 : vector<3x8xf32>
    %c0_21 = arith.constant 0 : index
    %c0_22 = arith.constant 0 : index
    %55 = vector.load %arg5[%c0_21, %c0_22] : memref<3x8xf32, #tpu.memory_space<vmem>>, vector<3x8xf32>
    tpu.vector_store %arg5[%c0_21, %c0_22], %54 {strides = array<i32>} : memref<3x8xf32, #tpu.memory_space<vmem>>, vector<3x8xf32>,
    return
  }
  func.func @transform_0(%arg0: i32) -> (i32, i32) {
    %c0_i32 = arith.constant 0 : i32
    %c0_i32_0 = arith.constant 0 : i32
    return %c0_i32, %arg0 : i32, i32
  }
  func.func @transform_1(%arg0: i32) -> (i32, i32) {
    %c0_i32 = arith.constant 0 : i32
    %c0_i32_0 = arith.constant 0 : i32
    %c0_i32_1 = arith.constant 0 : i32
    return %c0_i32, %c0_i32_0 : i32, i32
  }
  func.func @transform_2(%arg0: i32) -> (i32, i32) {
    %c0_i32 = arith.constant 0 : i32
    %c0_i32_0 = arith.constant 0 : i32
    %c0_i32_1 = arith.constant 0 : i32
    return %c0_i32, %c0_i32_0 : i32, i32
  }
  func.func @transform_3(%arg0: i32) -> (i32, i32) {
    %c0_i32 = arith.constant 0 : i32
    %c0_i32_0 = arith.constant 0 : i32
    %c0_i32_1 = arith.constant 0 : i32
    return %c0_i32, %c0_i32_0 : i32, i32
  }
  func.func @transform_4(%arg0: i32) -> (i32, i32) {
    %c0_i32 = arith.constant 0 : i32
    %c0_i32_0 = arith.constant 0 : i32
    return %c0_i32, %arg0 : i32, i32
  }
}

</mosaic_0001>

<llo_original>
// kernel: tpu_custom_call.1
$region0: #{tpu_custom_call.1}
  #allocation0 [shape = 'u32[]', space=smem, size = 0x4, offset = 0x4, fixed_abs, tag = 'smem constant byte address 0x4 - core index']
  #allocation1 [shape = 'u32[144,128]{1,0:T(1,128)}', space=vmem, size = 0x12000, scoped, tag = 'internal scratch']
  %s0 = inlined_call_operand.vmem [shape: f32[64,8], index: 0, kind: input, shape index: {}]
  %s1 = inlined_call_operand.vmem [shape: f32[1024,64], index: 1, kind: input, shape index: {}]
  %s2 = inlined_call_operand.vmem [shape: f32[3,512], index: 2, kind: input, shape index: {}]
  %s3 = inlined_call_operand.vmem [shape: f32[3,1], index: 3, kind: input, shape index: {}]
  %s4 = inlined_call_operand.hbm [shape: f32[3,8], index: 4, kind: output, shape index: {}]
  %s5 = sld [smem:[#allocation0]]
  $region26: #{tpu_custom_call.1} parent=0
    _
  %s7 = ssub.s32 1, %s5
  %s8 = scalar_select 0, %s7, %s5
  $region1: #{tpu_custom_call.1} parent=0
    #allocation2 [shape = 'u8[2048]{0}', space=vmem, size = 0x800, scoped, tag = 'output window, operand 0, single buffered']
    #allocation3 [shape = 's32[1]{0}', space=sflag, size = 0x4, scoped, tag = 'scoped memory for tpu_custom_call.1']
    %9 = vsyncpa [#allocation3], 0
    // Predicated region
    $region2: #{tpu_custom_call.1} parent=1 // pred_check
      _
    $region3: #{tpu_custom_call.1} parent=1 // pred_check_branch
      %11 = sbr.rel (0) target = $region5
    $region4: #{tpu_custom_call.1} parent=1 // pred_region
      _
    $region5: #{tpu_custom_call.1} parent=1 // pred_fallthru
      _
    // Predicated region
    $region6: #{tpu_custom_call.1} parent=1 // pred_check
      _
    $region7: #{tpu_custom_call.1} parent=1 // pred_check_branch
      %13 = sbr.rel (0) target = $region9
    $region8: #{tpu_custom_call.1} parent=1 // pred_region
      _
    $region9: #{tpu_custom_call.1} parent=1 // pred_fallthru
      _
    // Predicated region
    $region10: #{tpu_custom_call.1} parent=1 // pred_check
      _
    $region11: #{tpu_custom_call.1} parent=1 // pred_check_branch
      %15 = sbr.rel (0) target = $region13
    $region12: #{tpu_custom_call.1} parent=1 // pred_region
      _
    $region13: #{tpu_custom_call.1} parent=1 // pred_fallthru
      _
    // Predicated region
    $region14: #{tpu_custom_call.1} parent=1 // pred_check
      _
    $region15: #{tpu_custom_call.1} parent=1 // pred_check_branch
      %17 = sbr.rel (0) target = $region17
    $region16: #{tpu_custom_call.1} parent=1 // pred_region
      _
    $region17: #{tpu_custom_call.1} parent=1 // pred_fallthru
      _
    %v18 = vld [vmem:[%s0] sm:$0xff]
    %v19 = vld [vmem:[%s0 + $0x8] sm:$0xff]
    %v20 = vld [vmem:[%s0 + $0x10] sm:$0xff]
    %v21 = vld [vmem:[%s0 + $0x18] sm:$0xff]
    %v22 = vld [vmem:[%s0 + $0x20] sm:$0xff]
    %v23 = vld [vmem:[%s0 + $0x28] sm:$0xff]
    %v24 = vld [vmem:[%s0 + $0x30] sm:$0xff]
    %v25 = vld [vmem:[%s0 + $0x38] sm:$0xff]
    %v26 = vld [vmem:[%s1] sm:$0xff]
    %v27 = vld [vmem:[%s1 + $0x8] sm:$0xff]
    %v28 = vld [vmem:[%s1 + $0x10] sm:$0xff]
    %v29 = vld [vmem:[%s1 + $0x18] sm:$0xff]
    %v30 = vld [vmem:[%s1 + $0x20] sm:$0xff]
    %v31 = vld [vmem:[%s1 + $0x28] sm:$0xff]
    %v32 = vld [vmem:[%s1 + $0x30] sm:$0xff]
    %v33 = vld [vmem:[%s1 + $0x38] sm:$0xff]
    %v34 = vld [vmem:[%s1 + $0x40] sm:$0xff]
    %v35 = vld [vmem:[%s1 + $0x48] sm:$0xff]
    %v36 = vld [vmem:[%s1 + $0x50] sm:$0xff]
    %v37 = vld [vmem:[%s1 + $0x58] sm:$0xff]
    %v38 = vld [vmem:[%s1 + $0x60] sm:$0xff]
    %v39 = vld [vmem:[%s1 + $0x68] sm:$0xff]
    %v40 = vld [vmem:[%s1 + $0x70] sm:$0xff]
    %v41 = vld [vmem:[%s1 + $0x78] sm:$0xff]
    %v42 = vld [vmem:[%s1 + $0x80] sm:$0xff]
    %v43 = vld [vmem:[%s1 + $0x88] sm:$0xff]
    %v44 = vld [vmem:[%s1 + $0x90] sm:$0xff]
    %v45 = vld [vmem:[%s1 + $0x98] sm:$0xff]
    %v46 = vld [vmem:[%s1 + $0xa0] sm:$0xff]
    %v47 = vld [vmem:[%s1 + $0xa8] sm:$0xff]
    %v48 = vld [vmem:[%s1 + $0xb0] sm:$0xff]
    %v49 = vld [vmem:[%s1 + $0xb8] sm:$0xff]
    %v50 = vld [vmem:[%s1 + $0xc0] sm:$0xff]
    %v51 = vld [vmem:[%s1 + $0xc8] sm:$0xff]
    %v52 = vld [vmem:[%s1 + $0xd0] sm:$0xff]
    %v53 = vld [vmem:[%s1 + $0xd8] sm:$0xff]
    %v54 = vld [vmem:[%s1 + $0xe0] sm:$0xff]
    %v55 = vld [vmem:[%s1 + $0xe8] sm:$0xff]
    %v56 = vld [vmem:[%s1 + $0xf0] sm:$0xff]
    %v57 = vld [vmem:[%s1 + $0xf8] sm:$0xff]
    %v58 = vld [vmem:[%s1 + $0x100] sm:$0xff]
    %v59 = vld [vmem:[%s1 + $0x108] sm:$0xff]
    %v60 = vld [vmem:[%s1 + $0x110] sm:$0xff]
    %v61 = vld [vmem:[%s1 + $0x118] sm:$0xff]
    %v62 = vld [vmem:[%s1 + $0x120] sm:$0xff]
    %v63 = vld [vmem:[%s1 + $0x128] sm:$0xff]
    %v64 = vld [vmem:[%s1 + $0x130] sm:$0xff]
    %v65 = vld [vmem:[%s1 + $0x138] sm:$0xff]
    %v66 = vld [vmem:[%s1 + $0x140] sm:$0xff]
    %v67 = vld [vmem:[%s1 + $0x148] sm:$0xff]
    %v68 = vld [vmem:[%s1 + $0x150] sm:$0xff]
    %v69 = vld [vmem:[%s1 + $0x158] sm:$0xff]
    %v70 = vld [vmem:[%s1 + $0x160] sm:$0xff]
    %v71 = vld [vmem:[%s1 + $0x168] sm:$0xff]
    %v72 = vld [vmem:[%s1 + $0x170] sm:$0xff]
    %v73 = vld [vmem:[%s1 + $0x178] sm:$0xff]
    %v74 = vld [vmem:[%s1 + $0x180] sm:$0xff]
    %v75 = vld [vmem:[%s1 + $0x188] sm:$0xff]
    %v76 = vld [vmem:[%s1 + $0x190] sm:$0xff]
    %v77 = vld [vmem:[%s1 + $0x198] sm:$0xff]
    %v78 = vld [vmem:[%s1 + $0x1a0] sm:$0xff]
    %v79 = vld [vmem:[%s1 + $0x1a8] sm:$0xff]
    %v80 = vld [vmem:[%s1 + $0x1b0] sm:$0xff]
    %v81 = vld [vmem:[%s1 + $0x1b8] sm:$0xff]
    %v82 = vld [vmem:[%s1 + $0x1c0] sm:$0xff]
    %v83 = vld [vmem:[%s1 + $0x1c8] sm:$0xff]
    %v84 = vld [vmem:[%s1 + $0x1d0] sm:$0xff]
    %v85 = vld [vmem:[%s1 + $0x1d8] sm:$0xff]
    %v86 = vld [vmem:[%s1 + $0x1e0] sm:$0xff]
    %v87 = vld [vmem:[%s1 + $0x1e8] sm:$0xff]
    %v88 = vld [vmem:[%s1 + $0x1f0] sm:$0xff]
    %v89 = vld [vmem:[%s1 + $0x1f8] sm:$0xff]
    %v90 = vld [vmem:[%s1 + $0x200] sm:$0xff]
    %v91 = vld [vmem:[%s1 + $0x208] sm:$0xff]
    %v92 = vld [vmem:[%s1 + $0x210] sm:$0xff]
    %v93 = vld [vmem:[%s1 + $0x218] sm:$0xff]
    %v94 = vld [vmem:[%s1 + $0x220] sm:$0xff]
    %v95 = vld [vmem:[%s1 + $0x228] sm:$0xff]
    %v96 = vld [vmem:[%s1 + $0x230] sm:$0xff]
    %v97 = vld [vmem:[%s1 + $0x238] sm:$0xff]
    %v98 = vld [vmem:[%s1 + $0x240] sm:$0xff]
    %v99 = vld [vmem:[%s1 + $0x248] sm:$0xff]
    %v100 = vld [vmem:[%s1 + $0x250] sm:$0xff]
    %v101 = vld [vmem:[%s1 + $0x258] sm:$0xff]
    %v102 = vld [vmem:[%s1 + $0x260] sm:$0xff]
    %v103 = vld [vmem:[%s1 + $0x268] sm:$0xff]
    %v104 = vld [vmem:[%s1 + $0x270] sm:$0xff]
    %v105 = vld [vmem:[%s1 + $0x278] sm:$0xff]
    %v106 = vld [vmem:[%s1 + $0x280] sm:$0xff]
    %v107 = vld [vmem:[%s1 + $0x288] sm:$0xff]
    %v108 = vld [vmem:[%s1 + $0x290] sm:$0xff]
    %v109 = vld [vmem:[%s1 + $0x298] sm:$0xff]
    %v110 = vld [vmem:[%s1 + $0x2a0] sm:$0xff]
    %v111 = vld [vmem:[%s1 + $0x2a8] sm:$0xff]
    %v112 = vld [vmem:[%s1 + $0x2b0] sm:$0xff]
    %v113 = vld [vmem:[%s1 + $0x2b8] sm:$0xff]
    %v114 = vld [vmem:[%s1 + $0x2c0] sm:$0xff]
    %v115 = vld [vmem:[%s1 + $0x2c8] sm:$0xff]
    %v116 = vld [vmem:[%s1 + $0x2d0] sm:$0xff]
    %v117 = vld [vmem:[%s1 + $0x2d8] sm:$0xff]
    %v118 = vld [vmem:[%s1 + $0x2e0] sm:$0xff]
    %v119 = vld [vmem:[%s1 + $0x2e8] sm:$0xff]
    %v120 = vld [vmem:[%s1 + $0x2f0] sm:$0xff]
    %v121 = vld [vmem:[%s1 + $0x2f8] sm:$0xff]
    %v122 = vld [vmem:[%s1 + $0x300] sm:$0xff]
    %v123 = vld [vmem:[%s1 + $0x308] sm:$0xff]
    %v124 = vld [vmem:[%s1 + $0x310] sm:$0xff]
    %v125 = vld [vmem:[%s1 + $0x318] sm:$0xff]
    %v126 = vld [vmem:[%s1 + $0x320] sm:$0xff]
    %v127 = vld [vmem:[%s1 + $0x328] sm:$0xff]
    %v128 = vld [vmem:[%s1 + $0x330] sm:$0xff]
    %v129 = vld [vmem:[%s1 + $0x338] sm:$0xff]
    %v130 = vld [vmem:[%s1 + $0x340] sm:$0xff]
    %v131 = vld [vmem:[%s1 + $0x348] sm:$0xff]
    %v132 = vld [vmem:[%s1 + $0x350] sm:$0xff]
    %v133 = vld [vmem:[%s1 + $0x358] sm:$0xff]
    %v134 = vld [vmem:[%s1 + $0x360] sm:$0xff]
    %v135 = vld [vmem:[%s1 + $0x368] sm:$0xff]
    %v136 = vld [vmem:[%s1 + $0x370] sm:$0xff]
    %v137 = vld [vmem:[%s1 + $0x378] sm:$0xff]
    %v138 = vld [vmem:[%s1 + $0x380] sm:$0xff]
    %v139 = vld [vmem:[%s1 + $0x388] sm:$0xff]
    %v140 = vld [vmem:[%s1 + $0x390] sm:$0xff]
    %v141 = vld [vmem:[%s1 + $0x398] sm:$0xff]
    %v142 = vld [vmem:[%s1 + $0x3a0] sm:$0xff]
    %v143 = vld [vmem:[%s1 + $0x3a8] sm:$0xff]
    %v144 = vld [vmem:[%s1 + $0x3b0] sm:$0xff]
    %v145 = vld [vmem:[%s1 + $0x3b8] sm:$0xff]
    %v146 = vld [vmem:[%s1 + $0x3c0] sm:$0xff]
    %v147 = vld [vmem:[%s1 + $0x3c8] sm:$0xff]
    %v148 = vld [vmem:[%s1 + $0x3d0] sm:$0xff]
    %v149 = vld [vmem:[%s1 + $0x3d8] sm:$0xff]
    %v150 = vld [vmem:[%s1 + $0x3e0] sm:$0xff]
    %v151 = vld [vmem:[%s1 + $0x3e8] sm:$0xff]
    %v152 = vld [vmem:[%s1 + $0x3f0] sm:$0xff]
    %v153 = vld [vmem:[%s1 + $0x3f8] sm:$0xff]
    %vm154 = vcmask 523264
    %v156 = vsel %vm154, %v26, 0
    %v159 = vsel %vm154, %v27, 0
    %v162 = vsel %vm154, %v28, 0
    %v165 = vsel %vm154, %v29, 0
    %v168 = vsel %vm154, %v30, 0
    %v171 = vsel %vm154, %v31, 0
    %v174 = vsel %vm154, %v32, 0
    %v177 = vsel %vm154, %v33, 0
    %v180 = vsel %vm154, %v34, 0
    %v183 = vsel %vm154, %v35, 0
    %v186 = vsel %vm154, %v36, 0
    %v189 = vsel %vm154, %v37, 0
    %v192 = vsel %vm154, %v38, 0
    %v195 = vsel %vm154, %v39, 0
    %v198 = vsel %vm154, %v40, 0
    %v201 = vsel %vm154, %v41, 0
    %v204 = vsel %vm154, %v42, 0
    %v207 = vsel %vm154, %v43, 0
    %v210 = vsel %vm154, %v44, 0
    %v213 = vsel %vm154, %v45, 0
    %v216 = vsel %vm154, %v46, 0
    %v219 = vsel %vm154, %v47, 0
    %v222 = vsel %vm154, %v48, 0
    %v225 = vsel %vm154, %v49, 0
    %v228 = vsel %vm154, %v50, 0
    %v231 = vsel %vm154, %v51, 0
    %v234 = vsel %vm154, %v52, 0
    %v237 = vsel %vm154, %v53, 0
    %v240 = vsel %vm154, %v54, 0
    %v243 = vsel %vm154, %v55, 0
    %v246 = vsel %vm154, %v56, 0
    %v249 = vsel %vm154, %v57, 0
    %v252 = vsel %vm154, %v58, 0
    %v255 = vsel %vm154, %v59, 0
    %v258 = vsel %vm154, %v60, 0
    %v261 = vsel %vm154, %v61, 0
    %v264 = vsel %vm154, %v62, 0
    %v267 = vsel %vm154, %v63, 0
    %v270 = vsel %vm154, %v64, 0
    %v273 = vsel %vm154, %v65, 0
    %v276 = vsel %vm154, %v66, 0
    %v279 = vsel %vm154, %v67, 0
    %v282 = vsel %vm154, %v68, 0
    %v285 = vsel %vm154, %v69, 0
    %v288 = vsel %vm154, %v70, 0
    %v291 = vsel %vm154, %v71, 0
    %v294 = vsel %vm154, %v72, 0
    %v297 = vsel %vm154, %v73, 0
    %v300 = vsel %vm154, %v74, 0
    %v303 = vsel %vm154, %v75, 0
    %v306 = vsel %vm154, %v76, 0
    %v309 = vsel %vm154, %v77, 0
    %v312 = vsel %vm154, %v78, 0
    %v315 = vsel %vm154, %v79, 0
    %v318 = vsel %vm154, %v80, 0
    %v321 = vsel %vm154, %v81, 0
    %v324 = vsel %vm154, %v82, 0
    %v327 = vsel %vm154, %v83, 0
    %v330 = vsel %vm154, %v84, 0
    %v333 = vsel %vm154, %v85, 0
    %v336 = vsel %vm154, %v86, 0
    %v339 = vsel %vm154, %v87, 0
    %v342 = vsel %vm154, %v88, 0
    %v345 = vsel %vm154, %v89, 0
    %v348 = vsel %vm154, %v90, 0
    %v351 = vsel %vm154, %v91, 0
    %v354 = vsel %vm154, %v92, 0
    %v357 = vsel %vm154, %v93, 0
    %v360 = vsel %vm154, %v94, 0
    %v363 = vsel %vm154, %v95, 0
    %v366 = vsel %vm154, %v96, 0
    %v369 = vsel %vm154, %v97, 0
    %v372 = vsel %vm154, %v98, 0
    %v375 = vsel %vm154, %v99, 0
    %v378 = vsel %vm154, %v100, 0
    %v381 = vsel %vm154, %v101, 0
    %v384 = vsel %vm154, %v102, 0
    %v387 = vsel %vm154, %v103, 0
    %v390 = vsel %vm154, %v104, 0
    %v393 = vsel %vm154, %v105, 0
    %v396 = vsel %vm154, %v106, 0
    %v399 = vsel %vm154, %v107, 0
    %v402 = vsel %vm154, %v108, 0
    %v405 = vsel %vm154, %v109, 0
    %v408 = vsel %vm154, %v110, 0
    %v411 = vsel %vm154, %v111, 0
    %v414 = vsel %vm154, %v112, 0
    %v417 = vsel %vm154, %v113, 0
    %v420 = vsel %vm154, %v114, 0
    %v423 = vsel %vm154, %v115, 0
    %v426 = vsel %vm154, %v116, 0
    %v429 = vsel %vm154, %v117, 0
    %v432 = vsel %vm154, %v118, 0
    %v435 = vsel %vm154, %v119, 0
    %v438 = vsel %vm154, %v120, 0
    %v441 = vsel %vm154, %v121, 0
    %v444 = vsel %vm154, %v122, 0
    %v447 = vsel %vm154, %v123, 0
    %v450 = vsel %vm154, %v124, 0
    %v453 = vsel %vm154, %v125, 0
    %v456 = vsel %vm154, %v126, 0
    %v459 = vsel %vm154, %v127, 0
    %v462 = vsel %vm154, %v128, 0
    %v465 = vsel %vm154, %v129, 0
    %v468 = vsel %vm154, %v130, 0
    %v471 = vsel %vm154, %v131, 0
    %v474 = vsel %vm154, %v132, 0
    %v477 = vsel %vm154, %v133, 0
    %v480 = vsel %vm154, %v134, 0
    %v483 = vsel %vm154, %v135, 0
    %v486 = vsel %vm154, %v136, 0
    %v489 = vsel %vm154, %v137, 0
    %v492 = vsel %vm154, %v138, 0
    %v495 = vsel %vm154, %v139, 0
    %v498 = vsel %vm154, %v140, 0
    %v501 = vsel %vm154, %v141, 0
    %v504 = vsel %vm154, %v142, 0
    %v507 = vsel %vm154, %v143, 0
    %v510 = vsel %vm154, %v144, 0
    %v513 = vsel %vm154, %v145, 0
    %v516 = vsel %vm154, %v146, 0
    %v519 = vsel %vm154, %v147, 0
    %v522 = vsel %vm154, %v148, 0
    %v525 = vsel %vm154, %v149, 0
    %v528 = vsel %vm154, %v150, 0
    %v531 = vsel %vm154, %v151, 0
    %v534 = vsel %vm154, %v152, 0
    %v537 = vsel %vm154, %v153, 0
    %539 = vmatprep.subr.mxu0 0.0
    %540 = vmatpush1.msra.mxu0 %v18
    %541 = vmatprep.subr.mxu0 0.0
    %542 = vmatpush1.msra.mxu0 %v19
    %543 = vmatprep.subr.mxu0 0.0
    %544 = vmatpush1.msra.mxu0 %v20
    %545 = vmatprep.subr.mxu0 0.0
    %546 = vmatpush1.msra.mxu0 %v21
    %547 = vmatprep.subr.mxu0 0.0
    %548 = vmatpush1.msra.mxu0 %v22
    %549 = vmatprep.subr.mxu0 0.0
    %550 = vmatpush1.msra.mxu0 %v23
    %551 = vmatprep.subr.mxu0 0.0
    %552 = vmatpush1.msra.mxu0 %v24
    %553 = vmatprep.subr.mxu0 0.0
    %554 = vmatpush1.msra.mxu0 %v25
    %555 = vmatprep.subr.mxu0 0.0
    %556 = vmatpush1.msra.mxu0 0.0
    %557 = vmatprep.subr.mxu0 0.0
    %558 = vmatpush1.msra.mxu0 0.0
    %559 = vmatprep.subr.mxu0 0.0
    %560 = vmatpush1.msra.mxu0 0.0
    %561 = vmatprep.subr.mxu0 0.0
    %562 = vmatpush1.msra.mxu0 0.0
    %563 = vmatprep.subr.mxu0 0.0
    %564 = vmatpush1.msra.mxu0 0.0
    %565 = vmatprep.subr.mxu0 0.0
    %566 = vmatpush1.msra.mxu0 0.0
    %567 = vmatprep.subr.mxu0 0.0
    %568 = vmatpush1.msra.mxu0 0.0
    %569 = vmatprep.subr.mxu0 0.0
    %570 = vmatpush1.msra.mxu0 0.0
    %571 = vmatprep.subr.mxu0 0.0
    %572 = vmatpush1.msra.mxu0 0.0
    %573 = vmatprep.subr.mxu0 0.0
    %574 = vmatpush1.msra.mxu0 0.0
    %575 = vmatprep.subr.mxu0 0.0
    %576 = vmatpush1.msra.mxu0 0.0
    %577 = vmatprep.subr.mxu0 0.0
    %578 = vmatpush1.msra.mxu0 0.0
    %579 = vmatprep.subr.mxu0 0.0
    %580 = vmatpush1.msra.mxu0 0.0
    %581 = vmatprep.subr.mxu0 0.0
    %582 = vmatpush1.msra.mxu0 0.0
    %583 = vmatprep.subr.mxu0 0.0
    %584 = vmatpush1.msra.mxu0 0.0
    %585 = vmatprep.subr.mxu0 0.0
    %586 = vmatpush1.msra.mxu0 0.0
    %587 = vmatprep.subr.mxu0 0.0
    %588 = vmatpush1.msra.mxu0 0.0
    %589 = vmatprep.subr.mxu0 0.0
    %590 = vmatpush1.msra.mxu0 0.0
    %591 = vmatprep.subr.mxu0 0.0
    %592 = vmatpush1.msra.mxu0 0.0
    %593 = vmatprep.subr.mxu0 0.0
    %594 = vmatpush1.msra.mxu0 0.0
    %595 = vmatprep.subr.mxu0 0.0
    %596 = vmatpush1.msra.mxu0 0.0
    %597 = vmatprep.subr.mxu0 0.0
    %598 = vmatpush1.msra.mxu0 0.0
    %599 = vmatprep.subr.mxu0 0.0
    %600 = vmatpush1.msra.mxu0 0.0
    %601 = vmatprep.subr.mxu0 0.0
    %602 = vmatpush1.msra.mxu0 0.0
    %603 = vmatprep.mubr.f32.mxu0 0.0
    %604 = vmatmul.mubr.f32.gmra.mrb[0].mxu0 %v156
    %v605 = vpop.f32.mrb[0].mxu0
    %v606 = vadd.f32 0.0, %v605
    %v607 = vpop.f32.mrb[0].mxu0
    %608 = vmatprep.mubr.f32.mxu0 0.0
    %609 = vmatmul.mubr.f32.gmra.mrb[0].mxu0 %v159
    %v610 = vpop.f32.mrb[0].mxu0
    %v611 = vadd.f32 0.0, %v610
    %v612 = vpop.f32.mrb[0].mxu0
    %613 = vmatprep.mubr.f32.mxu0 0.0
    %614 = vmatmul.mubr.f32.gmra.mrb[0].mxu0 %v162
    %v615 = vpop.f32.mrb[0].mxu0
    %v616 = vadd.f32 0.0, %v615
    %v617 = vpop.f32.mrb[0].mxu0
    %618 = vmatprep.mubr.f32.mxu0 0.0
    %619 = vmatmul.mubr.f32.gmra.mrb[0].mxu0 %v165
    %v620 = vpop.f32.mrb[0].mxu0
    %v621 = vadd.f32 0.0, %v620
    %v622 = vpop.f32.mrb[0].mxu0
    %623 = vmatprep.mubr.f32.mxu0 0.0
    %624 = vmatmul.mubr.f32.gmra.mrb[0].mxu0 %v168
    %v625 = vpop.f32.mrb[0].mxu0
    %v626 = vadd.f32 0.0, %v625
    %v627 = vpop.f32.mrb[0].mxu0
    %628 = vmatprep.mubr.f32.mxu0 0.0
    %629 = vmatmul.mubr.f32.gmra.mrb[0].mxu0 %v171
    %v630 = vpop.f32.mrb[0].mxu0
    %v631 = vadd.f32 0.0, %v630
    %v632 = vpop.f32.mrb[0].mxu0
    %633 = vmatprep.mubr.f32.mxu0 0.0
    %634 = vmatmul.mubr.f32.gmra.mrb[0].mxu0 %v174
    %v635 = vpop.f32.mrb[0].mxu0
    %v636 = vadd.f32 0.0, %v635
    %v637 = vpop.f32.mrb[0].mxu0
    %638 = vmatprep.mubr.f32.mxu0 0.0
    %639 = vmatmul.mubr.f32.gmra.mrb[0].mxu0 %v177
    %v640 = vpop.f32.mrb[0].mxu0
    %v641 = vadd.f32 0.0, %v640
    %v642 = vpop.f32.mrb[0].mxu0
    %643 = vmatprep.mubr.f32.mxu0 0.0
    %644 = vmatmul.mubr.f32.gmra.mrb[0].mxu0 %v180
    %v645 = vpop.f32.mrb[0].mxu0
    %v646 = vadd.f32 0.0, %v645
    %v647 = vpop.f32.mrb[0].mxu0
    %648 = vmatprep.mubr.f32.mxu0 0.0
    %649 = vmatmul.mubr.f32.gmra.mrb[0].mxu0 %v183
    %v650 = vpop.f32.mrb[0].mxu0
    %v651 = vadd.f32 0.0, %v650
    %v652 = vpop.f32.mrb[0].mxu0
    %653 = vmatprep.mubr.f32.mxu0 0.0
    %654 = vmatmul.mubr.f32.gmra.mrb[0].mxu0 %v186
    %v655 = vpop.f32.mrb[0].mxu0
    %v656 = vadd.f32 0.0, %v655
    %v657 = vpop.f32.mrb[0].mxu0
    %658 = vmatprep.mubr.f32.mxu0 0.0
    %659 = vmatmul.mubr.f32.gmra.mrb[0].mxu0 %v189
    %v660 = vpop.f32.mrb[0].mxu0
    %v661 = vadd.f32 0.0, %v660
    %v662 = vpop.f32.mrb[0].mxu0
    %663 = vmatprep.mubr.f32.mxu0 0.0
    %664 = vmatmul.mubr.f32.gmra.mrb[0].mxu0 %v192
    %v665 = vpop.f32.mrb[0].mxu0
    %v666 = vadd.f32 0.0, %v665
    %v667 = vpop.f32.mrb[0].mxu0
    %668 = vmatprep.mubr.f32.mxu0 0.0
    %669 = vmatmul.mubr.f32.gmra.mrb[0].mxu0 %v195
    %v670 = vpop.f32.mrb[0].mxu0
    %v671 = vadd.f32 0.0, %v670
    %v672 = vpop.f32.mrb[0].mxu0
    %673 = vmatprep.mubr.f32.mxu0 0.0
    %674 = vmatmul.mubr.f32.gmra.mrb[0].mxu0 %v198
    %v675 = vpop.f32.mrb[0].mxu0
    %v676 = vadd.f32 0.0, %v675
    %v677 = vpop.f32.mrb[0].mxu0
    %678 = vmatprep.mubr.f32.mxu0 0.0
    %679 = vmatmul.mubr.f32.gmra.mrb[0].mxu0 %v201
    %v680 = vpop.f32.mrb[0].mxu0
    %v681 = vadd.f32 0.0, %v680
    %v682 = vpop.f32.mrb[0].mxu0
    %683 = vmatprep.mubr.f32.mxu0 0.0
    %684 = vmatmul.mubr.f32.gmra.mrb[0].mxu0 %v204
    %v685 = vpop.f32.mrb[0].mxu0
    %v686 = vadd.f32 0.0, %v685
    %v687 = vpop.f32.mrb[0].mxu0
    %688 = vmatprep.mubr.f32.mxu0 0.0
    %689 = vmatmul.mubr.f32.gmra.mrb[0].mxu0 %v207
    %v690 = vpop.f32.mrb[0].mxu0
    %v691 = vadd.f32 0.0, %v690
    %v692 = vpop.f32.mrb[0].mxu0
    %693 = vmatprep.mubr.f32.mxu0 0.0
    %694 = vmatmul.mubr.f32.gmra.mrb[0].mxu0 %v210
    %v695 = vpop.f32.mrb[0].mxu0
    %v696 = vadd.f32 0.0, %v695
    %v697 = vpop.f32.mrb[0].mxu0
    %698 = vmatprep.mubr.f32.mxu0 0.0
    %699 = vmatmul.mubr.f32.gmra.mrb[0].mxu0 %v213
    %v700 = vpop.f32.mrb[0].mxu0
    %v701 = vadd.f32 0.0, %v700
    %v702 = vpop.f32.mrb[0].mxu0
    %703 = vmatprep.mubr.f32.mxu0 0.0
    %704 = vmatmul.mubr.f32.gmra.mrb[0].mxu0 %v216
    %v705 = vpop.f32.mrb[0].mxu0
    %v706 = vadd.f32 0.0, %v705
    %v707 = vpop.f32.mrb[0].mxu0
    %708 = vmatprep.mubr.f32.mxu0 0.0
    %709 = vmatmul.mubr.f32.gmra.mrb[0].mxu0 %v219
    %v710 = vpop.f32.mrb[0].mxu0
    %v711 = vadd.f32 0.0, %v710
    %v712 = vpop.f32.mrb[0].mxu0
    %713 = vmatprep.mubr.f32.mxu0 0.0
    %714 = vmatmul.mubr.f32.gmra.mrb[0].mxu0 %v222
    %v715 = vpop.f32.mrb[0].mxu0
    %v716 = vadd.f32 0.0, %v715
    %v717 = vpop.f32.mrb[0].mxu0
    %718 = vmatprep.mubr.f32.mxu0 0.0
    %719 = vmatmul.mubr.f32.gmra.mrb[0].mxu0 %v225
    %v720 = vpop.f32.mrb[0].mxu0
    %v721 = vadd.f32 0.0, %v720
    %v722 = vpop.f32.mrb[0].mxu0
    %723 = vmatprep.mubr.f32.mxu0 0.0
    %724 = vmatmul.mubr.f32.gmra.mrb[0].mxu0 %v228
    %v725 = vpop.f32.mrb[0].mxu0
    %v726 = vadd.f32 0.0, %v725
    %v727 = vpop.f32.mrb[0].mxu0
    %728 = vmatprep.mubr.f32.mxu0 0.0
    %729 = vmatmul.mubr.f32.gmra.mrb[0].mxu0 %v231
    %v730 = vpop.f32.mrb[0].mxu0
    %v731 = vadd.f32 0.0, %v730
    %v732 = vpop.f32.mrb[0].mxu0
    %733 = vmatprep.mubr.f32.mxu0 0.0
    %734 = vmatmul.mubr.f32.gmra.mrb[0].mxu0 %v234
    %v735 = vpop.f32.mrb[0].mxu0
    %v736 = vadd.f32 0.0, %v735
    %v737 = vpop.f32.mrb[0].mxu0
    %738 = vmatprep.mubr.f32.mxu0 0.0
    %739 = vmatmul.mubr.f32.gmra.mrb[0].mxu0 %v237
    %v740 = vpop.f32.mrb[0].mxu0
    %v741 = vadd.f32 0.0, %v740
    %v742 = vpop.f32.mrb[0].mxu0
    %743 = vmatprep.mubr.f32.mxu0 0.0
    %744 = vmatmul.mubr.f32.gmra.mrb[0].mxu0 %v240
    %v745 = vpop.f32.mrb[0].mxu0
    %v746 = vadd.f32 0.0, %v745
    %v747 = vpop.f32.mrb[0].mxu0
    %748 = vmatprep.mubr.f32.mxu0 0.0
    %749 = vmatmul.mubr.f32.gmra.mrb[0].mxu0 %v243
    %v750 = vpop.f32.mrb[0].mxu0
    %v751 = vadd.f32 0.0, %v750
    %v752 = vpop.f32.mrb[0].mxu0
    %753 = vmatprep.mubr.f32.mxu0 0.0
    %754 = vmatmul.mubr.f32.gmra.mrb[0].mxu0 %v246
    %v755 = vpop.f32.mrb[0].mxu0
    %v756 = vadd.f32 0.0, %v755
    %v757 = vpop.f32.mrb[0].mxu0
    %758 = vmatprep.mubr.f32.mxu0 0.0
    %759 = vmatmul.mubr.f32.gmra.mrb[0].mxu0 %v249
    %v760 = vpop.f32.mrb[0].mxu0
    %v761 = vadd.f32 0.0, %v760
    %v762 = vpop.f32.mrb[0].mxu0
    %763 = vmatprep.mubr.f32.mxu0 0.0
    %764 = vmatmul.mubr.f32.gmra.mrb[0].mxu0 %v252
    %v765 = vpop.f32.mrb[0].mxu0
    %v766 = vadd.f32 0.0, %v765
    %v767 = vpop.f32.mrb[0].mxu0
    %768 = vmatprep.mubr.f32.mxu0 0.0
    %769 = vmatmul.mubr.f32.gmra.mrb[0].mxu0 %v255
    %v770 = vpop.f32.mrb[0].mxu0
    %v771 = vadd.f32 0.0, %v770
    %v772 = vpop.f32.mrb[0].mxu0
    %773 = vmatprep.mubr.f32.mxu0 0.0
    %774 = vmatmul.mubr.f32.gmra.mrb[0].mxu0 %v258
    %v775 = vpop.f32.mrb[0].mxu0
    %v776 = vadd.f32 0.0, %v775
    %v777 = vpop.f32.mrb[0].mxu0
    %778 = vmatprep.mubr.f32.mxu0 0.0
    %779 = vmatmul.mubr.f32.gmra.mrb[0].mxu0 %v261
    %v780 = vpop.f32.mrb[0].mxu0
    %v781 = vadd.f32 0.0, %v780
    %v782 = vpop.f32.mrb[0].mxu0
    %783 = vmatprep.mubr.f32.mxu0 0.0
    %784 = vmatmul.mubr.f32.gmra.mrb[0].mxu0 %v264
    %v785 = vpop.f32.mrb[0].mxu0
    %v786 = vadd.f32 0.0, %v785
    %v787 = vpop.f32.mrb[0].mxu0
    %788 = vmatprep.mubr.f32.mxu0 0.0
    %789 = vmatmul.mubr.f32.gmra.mrb[0].mxu0 %v267
    %v790 = vpop.f32.mrb[0].mxu0
    %v791 = vadd.f32 0.0, %v790
    %v792 = vpop.f32.mrb[0].mxu0
    %793 = vmatprep.mubr.f32.mxu0 0.0
    %794 = vmatmul.mubr.f32.gmra.mrb[0].mxu0 %v270
    %v795 = vpop.f32.mrb[0].mxu0
    %v796 = vadd.f32 0.0, %v795
    %v797 = vpop.f32.mrb[0].mxu0
    %798 = vmatprep.mubr.f32.mxu0 0.0
    %799 = vmatmul.mubr.f32.gmra.mrb[0].mxu0 %v273
    %v800 = vpop.f32.mrb[0].mxu0
    %v801 = vadd.f32 0.0, %v800
    %v802 = vpop.f32.mrb[0].mxu0
    %803 = vmatprep.mubr.f32.mxu0 0.0
    %804 = vmatmul.mubr.f32.gmra.mrb[0].mxu0 %v276
    %v805 = vpop.f32.mrb[0].mxu0
    %v806 = vadd.f32 0.0, %v805
    %v807 = vpop.f32.mrb[0].mxu0
    %808 = vmatprep.mubr.f32.mxu0 0.0
    %809 = vmatmul.mubr.f32.gmra.mrb[0].mxu0 %v279
    %v810 = vpop.f32.mrb[0].mxu0
    %v811 = vadd.f32 0.0, %v810
    %v812 = vpop.f32.mrb[0].mxu0
    %813 = vmatprep.mubr.f32.mxu0 0.0
    %814 = vmatmul.mubr.f32.gmra.mrb[0].mxu0 %v282
    %v815 = vpop.f32.mrb[0].mxu0
    %v816 = vadd.f32 0.0, %v815
    %v817 = vpop.f32.mrb[0].mxu0
    %818 = vmatprep.mubr.f32.mxu0 0.0
    %819 = vmatmul.mubr.f32.gmra.mrb[0].mxu0 %v285
    %v820 = vpop.f32.mrb[0].mxu0
    %v821 = vadd.f32 0.0, %v820
    %v822 = vpop.f32.mrb[0].mxu0
    %823 = vmatprep.mubr.f32.mxu0 0.0
    %824 = vmatmul.mubr.f32.gmra.mrb[0].mxu0 %v288
    %v825 = vpop.f32.mrb[0].mxu0
    %v826 = vadd.f32 0.0, %v825
    %v827 = vpop.f32.mrb[0].mxu0
    %828 = vmatprep.mubr.f32.mxu0 0.0
    %829 = vmatmul.mubr.f32.gmra.mrb[0].mxu0 %v291
    %v830 = vpop.f32.mrb[0].mxu0
    %v831 = vadd.f32 0.0, %v830
    %v832 = vpop.f32.mrb[0].mxu0
    %833 = vmatprep.mubr.f32.mxu0 0.0
    %834 = vmatmul.mubr.f32.gmra.mrb[0].mxu0 %v294
    %v835 = vpop.f32.mrb[0].mxu0
    %v836 = vadd.f32 0.0, %v835
    %v837 = vpop.f32.mrb[0].mxu0
    %838 = vmatprep.mubr.f32.mxu0 0.0
    %839 = vmatmul.mubr.f32.gmra.mrb[0].mxu0 %v297
    %v840 = vpop.f32.mrb[0].mxu0
    %v841 = vadd.f32 0.0, %v840
    %v842 = vpop.f32.mrb[0].mxu0
    %843 = vmatprep.mubr.f32.mxu0 0.0
    %844 = vmatmul.mubr.f32.gmra.mrb[0].mxu0 %v300
    %v845 = vpop.f32.mrb[0].mxu0
    %v846 = vadd.f32 0.0, %v845
    %v847 = vpop.f32.mrb[0].mxu0
    %848 = vmatprep.mubr.f32.mxu0 0.0
    %849 = vmatmul.mubr.f32.gmra.mrb[0].mxu0 %v303
    %v850 = vpop.f32.mrb[0].mxu0
    %v851 = vadd.f32 0.0, %v850
    %v852 = vpop.f32.mrb[0].mxu0
    %853 = vmatprep.mubr.f32.mxu0 0.0
    %854 = vmatmul.mubr.f32.gmra.mrb[0].mxu0 %v306
    %v855 = vpop.f32.mrb[0].mxu0
    %v856 = vadd.f32 0.0, %v855
    %v857 = vpop.f32.mrb[0].mxu0
    %858 = vmatprep.mubr.f32.mxu0 0.0
    %859 = vmatmul.mubr.f32.gmra.mrb[0].mxu0 %v309
    %v860 = vpop.f32.mrb[0].mxu0
    %v861 = vadd.f32 0.0, %v860
    %v862 = vpop.f32.mrb[0].mxu0
    %863 = vmatprep.mubr.f32.mxu0 0.0
    %864 = vmatmul.mubr.f32.gmra.mrb[0].mxu0 %v312
    %v865 = vpop.f32.mrb[0].mxu0
    %v866 = vadd.f32 0.0, %v865
    %v867 = vpop.f32.mrb[0].mxu0
    %868 = vmatprep.mubr.f32.mxu0 0.0
    %869 = vmatmul.mubr.f32.gmra.mrb[0].mxu0 %v315
    %v870 = vpop.f32.mrb[0].mxu0
    %v871 = vadd.f32 0.0, %v870
    %v872 = vpop.f32.mrb[0].mxu0
    %873 = vmatprep.mubr.f32.mxu0 0.0
    %874 = vmatmul.mubr.f32.gmra.mrb[0].mxu0 %v318
    %v875 = vpop.f32.mrb[0].mxu0
    %v876 = vadd.f32 0.0, %v875
    %v877 = vpop.f32.mrb[0].mxu0
    %878 = vmatprep.mubr.f32.mxu0 0.0
    %879 = vmatmul.mubr.f32.gmra.mrb[0].mxu0 %v321
    %v880 = vpop.f32.mrb[0].mxu0
    %v881 = vadd.f32 0.0, %v880
    %v882 = vpop.f32.mrb[0].mxu0
    %883 = vmatprep.mubr.f32.mxu0 0.0
    %884 = vmatmul.mubr.f32.gmra.mrb[0].mxu0 %v324
    %v885 = vpop.f32.mrb[0].mxu0
    %v886 = vadd.f32 0.0, %v885
    %v887 = vpop.f32.mrb[0].mxu0
    %888 = vmatprep.mubr.f32.mxu0 0.0
    %889 = vmatmul.mubr.f32.gmra.mrb[0].mxu0 %v327
    %v890 = vpop.f32.mrb[0].mxu0
    %v891 = vadd.f32 0.0, %v890
    %v892 = vpop.f32.mrb[0].mxu0
    %893 = vmatprep.mubr.f32.mxu0 0.0
    %894 = vmatmul.mubr.f32.gmra.mrb[0].mxu0 %v330
    %v895 = vpop.f32.mrb[0].mxu0
    %v896 = vadd.f32 0.0, %v895
    %v897 = vpop.f32.mrb[0].mxu0
    %898 = vmatprep.mubr.f32.mxu0 0.0
    %899 = vmatmul.mubr.f32.gmra.mrb[0].mxu0 %v333
    %v900 = vpop.f32.mrb[0].mxu0
    %v901 = vadd.f32 0.0, %v900
    %v902 = vpop.f32.mrb[0].mxu0
    %903 = vmatprep.mubr.f32.mxu0 0.0
    %904 = vmatmul.mubr.f32.gmra.mrb[0].mxu0 %v336
    %v905 = vpop.f32.mrb[0].mxu0
    %v906 = vadd.f32 0.0, %v905
    %v907 = vpop.f32.mrb[0].mxu0
    %908 = vmatprep.mubr.f32.mxu0 0.0
    %909 = vmatmul.mubr.f32.gmra.mrb[0].mxu0 %v339
    %v910 = vpop.f32.mrb[0].mxu0
    %v911 = vadd.f32 0.0, %v910
    %v912 = vpop.f32.mrb[0].mxu0
    %913 = vmatprep.mubr.f32.mxu0 0.0
    %914 = vmatmul.mubr.f32.gmra.mrb[0].mxu0 %v342
    %v915 = vpop.f32.mrb[0].mxu0
    %v916 = vadd.f32 0.0, %v915
    %v917 = vpop.f32.mrb[0].mxu0
    %918 = vmatprep.mubr.f32.mxu0 0.0
    %919 = vmatmul.mubr.f32.gmra.mrb[0].mxu0 %v345
    %v920 = vpop.f32.mrb[0].mxu0
    %v921 = vadd.f32 0.0, %v920
    %v922 = vpop.f32.mrb[0].mxu0
    %923 = vmatprep.mubr.f32.mxu0 0.0
    %924 = vmatmul.mubr.f32.gmra.mrb[0].mxu0 %v348
    %v925 = vpop.f32.mrb[0].mxu0
    %v926 = vadd.f32 0.0, %v925
    %v927 = vpop.f32.mrb[0].mxu0
    %928 = vmatprep.mubr.f32.mxu0 0.0
    %929 = vmatmul.mubr.f32.gmra.mrb[0].mxu0 %v351
    %v930 = vpop.f32.mrb[0].mxu0
    %v931 = vadd.f32 0.0, %v930
    %v932 = vpop.f32.mrb[0].mxu0
    %933 = vmatprep.mubr.f32.mxu0 0.0
    %934 = vmatmul.mubr.f32.gmra.mrb[0].mxu0 %v354
    %v935 = vpop.f32.mrb[0].mxu0
    %v936 = vadd.f32 0.0, %v935
    %v937 = vpop.f32.mrb[0].mxu0
    %938 = vmatprep.mubr.f32.mxu0 0.0
    %939 = vmatmul.mubr.f32.gmra.mrb[0].mxu0 %v357
    %v940 = vpop.f32.mrb[0].mxu0
    %v941 = vadd.f32 0.0, %v940
    %v942 = vpop.f32.mrb[0].mxu0
    %943 = vmatprep.mubr.f32.mxu0 0.0
    %944 = vmatmul.mubr.f32.gmra.mrb[0].mxu0 %v360
    %v945 = vpop.f32.mrb[0].mxu0
    %v946 = vadd.f32 0.0, %v945
    %v947 = vpop.f32.mrb[0].mxu0
    %948 = vmatprep.mubr.f32.mxu0 0.0
    %949 = vmatmul.mubr.f32.gmra.mrb[0].mxu0 %v363
    %v950 = vpop.f32.mrb[0].mxu0
    %v951 = vadd.f32 0.0, %v950
    %v952 = vpop.f32.mrb[0].mxu0
    %953 = vmatprep.mubr.f32.mxu0 0.0
    %954 = vmatmul.mubr.f32.gmra.mrb[0].mxu0 %v366
    %v955 = vpop.f32.mrb[0].mxu0
    %v956 = vadd.f32 0.0, %v955
    %v957 = vpop.f32.mrb[0].mxu0
    %958 = vmatprep.mubr.f32.mxu0 0.0
    %959 = vmatmul.mubr.f32.gmra.mrb[0].mxu0 %v369
    %v960 = vpop.f32.mrb[0].mxu0
    %v961 = vadd.f32 0.0, %v960
    %v962 = vpop.f32.mrb[0].mxu0
    %963 = vmatprep.mubr.f32.mxu0 0.0
    %964 = vmatmul.mubr.f32.gmra.mrb[0].mxu0 %v372
    %v965 = vpop.f32.mrb[0].mxu0
    %v966 = vadd.f32 0.0, %v965
    %v967 = vpop.f32.mrb[0].mxu0
    %968 = vmatprep.mubr.f32.mxu0 0.0
    %969 = vmatmul.mubr.f32.gmra.mrb[0].mxu0 %v375
    %v970 = vpop.f32.mrb[0].mxu0
    %v971 = vadd.f32 0.0, %v970
    %v972 = vpop.f32.mrb[0].mxu0
    %973 = vmatprep.mubr.f32.mxu0 0.0
    %974 = vmatmul.mubr.f32.gmra.mrb[0].mxu0 %v378
    %v975 = vpop.f32.mrb[0].mxu0
    %v976 = vadd.f32 0.0, %v975
    %v977 = vpop.f32.mrb[0].mxu0
    %978 = vmatprep.mubr.f32.mxu0 0.0
    %979 = vmatmul.mubr.f32.gmra.mrb[0].mxu0 %v381
    %v980 = vpop.f32.mrb[0].mxu0
    %v981 = vadd.f32 0.0, %v980
    %v982 = vpop.f32.mrb[0].mxu0
    %983 = vmatprep.mubr.f32.mxu0 0.0
    %984 = vmatmul.mubr.f32.gmra.mrb[0].mxu0 %v384
    %v985 = vpop.f32.mrb[0].mxu0
    %v986 = vadd.f32 0.0, %v985
    %v987 = vpop.f32.mrb[0].mxu0
    %988 = vmatprep.mubr.f32.mxu0 0.0
    %989 = vmatmul.mubr.f32.gmra.mrb[0].mxu0 %v387
    %v990 = vpop.f32.mrb[0].mxu0
    %v991 = vadd.f32 0.0, %v990
    %v992 = vpop.f32.mrb[0].mxu0
    %993 = vmatprep.mubr.f32.mxu0 0.0
    %994 = vmatmul.mubr.f32.gmra.mrb[0].mxu0 %v390
    %v995 = vpop.f32.mrb[0].mxu0
    %v996 = vadd.f32 0.0, %v995
    %v997 = vpop.f32.mrb[0].mxu0
    %998 = vmatprep.mubr.f32.mxu0 0.0
    %999 = vmatmul.mubr.f32.gmra.mrb[0].mxu0 %v393
    %v1000 = vpop.f32.mrb[0].mxu0
    %v1001 = vadd.f32 0.0, %v1000
    %v1002 = vpop.f32.mrb[0].mxu0
    %1003 = vmatprep.mubr.f32.mxu0 0.0
    %1004 = vmatmul.mubr.f32.gmra.mrb[0].mxu0 %v396
    %v1005 = vpop.f32.mrb[0].mxu0
    %v1006 = vadd.f32 0.0, %v1005
    %v1007 = vpop.f32.mrb[0].mxu0
    %1008 = vmatprep.mubr.f32.mxu0 0.0
    %1009 = vmatmul.mubr.f32.gmra.mrb[0].mxu0 %v399
    %v1010 = vpop.f32.mrb[0].mxu0
    %v1011 = vadd.f32 0.0, %v1010
    %v1012 = vpop.f32.mrb[0].mxu0
    %1013 = vmatprep.mubr.f32.mxu0 0.0
    %1014 = vmatmul.mubr.f32.gmra.mrb[0].mxu0 %v402
    %v1015 = vpop.f32.mrb[0].mxu0
    %v1016 = vadd.f32 0.0, %v1015
    %v1017 = vpop.f32.mrb[0].mxu0
    %1018 = vmatprep.mubr.f32.mxu0 0.0
    %1019 = vmatmul.mubr.f32.gmra.mrb[0].mxu0 %v405
    %v1020 = vpop.f32.mrb[0].mxu0
    %v1021 = vadd.f32 0.0, %v1020
    %v1022 = vpop.f32.mrb[0].mxu0
    %1023 = vmatprep.mubr.f32.mxu0 0.0
    %1024 = vmatmul.mubr.f32.gmra.mrb[0].mxu0 %v408
    %v1025 = vpop.f32.mrb[0].mxu0
    %v1026 = vadd.f32 0.0, %v1025
    %v1027 = vpop.f32.mrb[0].mxu0
    %1028 = vmatprep.mubr.f32.mxu0 0.0
    %1029 = vmatmul.mubr.f32.gmra.mrb[0].mxu0 %v411
    %v1030 = vpop.f32.mrb[0].mxu0
    %v1031 = vadd.f32 0.0, %v1030
    %v1032 = vpop.f32.mrb[0].mxu0
    %1033 = vmatprep.mubr.f32.mxu0 0.0
    %1034 = vmatmul.mubr.f32.gmra.mrb[0].mxu0 %v414
    %v1035 = vpop.f32.mrb[0].mxu0
    %v1036 = vadd.f32 0.0, %v1035
    %v1037 = vpop.f32.mrb[0].mxu0
    %1038 = vmatprep.mubr.f32.mxu0 0.0
    %1039 = vmatmul.mubr.f32.gmra.mrb[0].mxu0 %v417
    %v1040 = vpop.f32.mrb[0].mxu0
    %v1041 = vadd.f32 0.0, %v1040
    %v1042 = vpop.f32.mrb[0].mxu0
    %1043 = vmatprep.mubr.f32.mxu0 0.0
    %1044 = vmatmul.mubr.f32.gmra.mrb[0].mxu0 %v420
    %v1045 = vpop.f32.mrb[0].mxu0
    %v1046 = vadd.f32 0.0, %v1045
    %v1047 = vpop.f32.mrb[0].mxu0
    %1048 = vmatprep.mubr.f32.mxu0 0.0
    %1049 = vmatmul.mubr.f32.gmra.mrb[0].mxu0 %v423
    %v1050 = vpop.f32.mrb[0].mxu0
    %v1051 = vadd.f32 0.0, %v1050
    %v1052 = vpop.f32.mrb[0].mxu0
    %1053 = vmatprep.mubr.f32.mxu0 0.0
    %1054 = vmatmul.mubr.f32.gmra.mrb[0].mxu0 %v426
    %v1055 = vpop.f32.mrb[0].mxu0
    %v1056 = vadd.f32 0.0, %v1055
    %v1057 = vpop.f32.mrb[0].mxu0
    %1058 = vmatprep.mubr.f32.mxu0 0.0
    %1059 = vmatmul.mubr.f32.gmra.mrb[0].mxu0 %v429
    %v1060 = vpop.f32.mrb[0].mxu0
    %v1061 = vadd.f32 0.0, %v1060
    %v1062 = vpop.f32.mrb[0].mxu0
    %1063 = vmatprep.mubr.f32.mxu0 0.0
    %1064 = vmatmul.mubr.f32.gmra.mrb[0].mxu0 %v432
    %v1065 = vpop.f32.mrb[0].mxu0
    %v1066 = vadd.f32 0.0, %v1065
    %v1067 = vpop.f32.mrb[0].mxu0
    %1068 = vmatprep.mubr.f32.mxu0 0.0
    %1069 = vmatmul.mubr.f32.gmra.mrb[0].mxu0 %v435
    %v1070 = vpop.f32.mrb[0].mxu0
    %v1071 = vadd.f32 0.0, %v1070
    %v1072 = vpop.f32.mrb[0].mxu0
    %1073 = vmatprep.mubr.f32.mxu0 0.0
    %1074 = vmatmul.mubr.f32.gmra.mrb[0].mxu0 %v438
    %v1075 = vpop.f32.mrb[0].mxu0
    %v1076 = vadd.f32 0.0, %v1075
    %v1077 = vpop.f32.mrb[0].mxu0
    %1078 = vmatprep.mubr.f32.mxu0 0.0
    %1079 = vmatmul.mubr.f32.gmra.mrb[0].mxu0 %v441
    %v1080 = vpop.f32.mrb[0].mxu0
    %v1081 = vadd.f32 0.0, %v1080
    %v1082 = vpop.f32.mrb[0].mxu0
    %1083 = vmatprep.mubr.f32.mxu0 0.0
    %1084 = vmatmul.mubr.f32.gmra.mrb[0].mxu0 %v444
    %v1085 = vpop.f32.mrb[0].mxu0
    %v1086 = vadd.f32 0.0, %v1085
    %v1087 = vpop.f32.mrb[0].mxu0
    %1088 = vmatprep.mubr.f32.mxu0 0.0
    %1089 = vmatmul.mubr.f32.gmra.mrb[0].mxu0 %v447
    %v1090 = vpop.f32.mrb[0].mxu0
    %v1091 = vadd.f32 0.0, %v1090
    %v1092 = vpop.f32.mrb[0].mxu0
    %1093 = vmatprep.mubr.f32.mxu0 0.0
    %1094 = vmatmul.mubr.f32.gmra.mrb[0].mxu0 %v450
    %v1095 = vpop.f32.mrb[0].mxu0
    %v1096 = vadd.f32 0.0, %v1095
    %v1097 = vpop.f32.mrb[0].mxu0
    %1098 = vmatprep.mubr.f32.mxu0 0.0
    %1099 = vmatmul.mubr.f32.gmra.mrb[0].mxu0 %v453
    %v1100 = vpop.f32.mrb[0].mxu0
    %v1101 = vadd.f32 0.0, %v1100
    %v1102 = vpop.f32.mrb[0].mxu0
    %1103 = vmatprep.mubr.f32.mxu0 0.0
    %1104 = vmatmul.mubr.f32.gmra.mrb[0].mxu0 %v456
    %v1105 = vpop.f32.mrb[0].mxu0
    %v1106 = vadd.f32 0.0, %v1105
    %v1107 = vpop.f32.mrb[0].mxu0
    %1108 = vmatprep.mubr.f32.mxu0 0.0
    %1109 = vmatmul.mubr.f32.gmra.mrb[0].mxu0 %v459
    %v1110 = vpop.f32.mrb[0].mxu0
    %v1111 = vadd.f32 0.0, %v1110
    %v1112 = vpop.f32.mrb[0].mxu0
    %1113 = vmatprep.mubr.f32.mxu0 0.0
    %1114 = vmatmul.mubr.f32.gmra.mrb[0].mxu0 %v462
    %v1115 = vpop.f32.mrb[0].mxu0
    %v1116 = vadd.f32 0.0, %v1115
    %v1117 = vpop.f32.mrb[0].mxu0
    %1118 = vmatprep.mubr.f32.mxu0 0.0
    %1119 = vmatmul.mubr.f32.gmra.mrb[0].mxu0 %v465
    %v1120 = vpop.f32.mrb[0].mxu0
    %v1121 = vadd.f32 0.0, %v1120
    %v1122 = vpop.f32.mrb[0].mxu0
    %1123 = vmatprep.mubr.f32.mxu0 0.0
    %1124 = vmatmul.mubr.f32.gmra.mrb[0].mxu0 %v468
    %v1125 = vpop.f32.mrb[0].mxu0
    %v1126 = vadd.f32 0.0, %v1125
    %v1127 = vpop.f32.mrb[0].mxu0
    %1128 = vmatprep.mubr.f32.mxu0 0.0
    %1129 = vmatmul.mubr.f32.gmra.mrb[0].mxu0 %v471
    %v1130 = vpop.f32.mrb[0].mxu0
    %v1131 = vadd.f32 0.0, %v1130
    %v1132 = vpop.f32.mrb[0].mxu0
    %1133 = vmatprep.mubr.f32.mxu0 0.0
    %1134 = vmatmul.mubr.f32.gmra.mrb[0].mxu0 %v474
    %v1135 = vpop.f32.mrb[0].mxu0
    %v1136 = vadd.f32 0.0, %v1135
    %v1137 = vpop.f32.mrb[0].mxu0
    %1138 = vmatprep.mubr.f32.mxu0 0.0
    %1139 = vmatmul.mubr.f32.gmra.mrb[0].mxu0 %v477
    %v1140 = vpop.f32.mrb[0].mxu0
    %v1141 = vadd.f32 0.0, %v1140
    %v1142 = vpop.f32.mrb[0].mxu0
    %1143 = vmatprep.mubr.f32.mxu0 0.0
    %1144 = vmatmul.mubr.f32.gmra.mrb[0].mxu0 %v480
    %v1145 = vpop.f32.mrb[0].mxu0
    %v1146 = vadd.f32 0.0, %v1145
    %v1147 = vpop.f32.mrb[0].mxu0
    %1148 = vmatprep.mubr.f32.mxu0 0.0
    %1149 = vmatmul.mubr.f32.gmra.mrb[0].mxu0 %v483
    %v1150 = vpop.f32.mrb[0].mxu0
    %v1151 = vadd.f32 0.0, %v1150
    %v1152 = vpop.f32.mrb[0].mxu0
    %1153 = vmatprep.mubr.f32.mxu0 0.0
    %1154 = vmatmul.mubr.f32.gmra.mrb[0].mxu0 %v486
    %v1155 = vpop.f32.mrb[0].mxu0
    %v1156 = vadd.f32 0.0, %v1155
    %v1157 = vpop.f32.mrb[0].mxu0
    %1158 = vmatprep.mubr.f32.mxu0 0.0
    %1159 = vmatmul.mubr.f32.gmra.mrb[0].mxu0 %v489
    %v1160 = vpop.f32.mrb[0].mxu0
    %v1161 = vadd.f32 0.0, %v1160
    %v1162 = vpop.f32.mrb[0].mxu0
    %1163 = vmatprep.mubr.f32.mxu0 0.0
    %1164 = vmatmul.mubr.f32.gmra.mrb[0].mxu0 %v492
    %v1165 = vpop.f32.mrb[0].mxu0
    %v1166 = vadd.f32 0.0, %v1165
    %v1167 = vpop.f32.mrb[0].mxu0
    %1168 = vmatprep.mubr.f32.mxu0 0.0
    %1169 = vmatmul.mubr.f32.gmra.mrb[0].mxu0 %v495
    %v1170 = vpop.f32.mrb[0].mxu0
    %v1171 = vadd.f32 0.0, %v1170
    %v1172 = vpop.f32.mrb[0].mxu0
    %1173 = vmatprep.mubr.f32.mxu0 0.0
    %1174 = vmatmul.mubr.f32.gmra.mrb[0].mxu0 %v498
    %v1175 = vpop.f32.mrb[0].mxu0
    %v1176 = vadd.f32 0.0, %v1175
    %v1177 = vpop.f32.mrb[0].mxu0
    %1178 = vmatprep.mubr.f32.mxu0 0.0
    %1179 = vmatmul.mubr.f32.gmra.mrb[0].mxu0 %v501
    %v1180 = vpop.f32.mrb[0].mxu0
    %v1181 = vadd.f32 0.0, %v1180
    %v1182 = vpop.f32.mrb[0].mxu0
    %1183 = vmatprep.mubr.f32.mxu0 0.0
    %1184 = vmatmul.mubr.f32.gmra.mrb[0].mxu0 %v504
    %v1185 = vpop.f32.mrb[0].mxu0
    %v1186 = vadd.f32 0.0, %v1185
    %v1187 = vpop.f32.mrb[0].mxu0
    %1188 = vmatprep.mubr.f32.mxu0 0.0
    %1189 = vmatmul.mubr.f32.gmra.mrb[0].mxu0 %v507
    %v1190 = vpop.f32.mrb[0].mxu0
    %v1191 = vadd.f32 0.0, %v1190
    %v1192 = vpop.f32.mrb[0].mxu0
    %1193 = vmatprep.mubr.f32.mxu0 0.0
    %1194 = vmatmul.mubr.f32.gmra.mrb[0].mxu0 %v510
    %v1195 = vpop.f32.mrb[0].mxu0
    %v1196 = vadd.f32 0.0, %v1195
    %v1197 = vpop.f32.mrb[0].mxu0
    %1198 = vmatprep.mubr.f32.mxu0 0.0
    %1199 = vmatmul.mubr.f32.gmra.mrb[0].mxu0 %v513
    %v1200 = vpop.f32.mrb[0].mxu0
    %v1201 = vadd.f32 0.0, %v1200
    %v1202 = vpop.f32.mrb[0].mxu0
    %1203 = vmatprep.mubr.f32.mxu0 0.0
    %1204 = vmatmul.mubr.f32.gmra.mrb[0].mxu0 %v516
    %v1205 = vpop.f32.mrb[0].mxu0
    %v1206 = vadd.f32 0.0, %v1205
    %v1207 = vpop.f32.mrb[0].mxu0
    %1208 = vmatprep.mubr.f32.mxu0 0.0
    %1209 = vmatmul.mubr.f32.gmra.mrb[0].mxu0 %v519
    %v1210 = vpop.f32.mrb[0].mxu0
    %v1211 = vadd.f32 0.0, %v1210
    %v1212 = vpop.f32.mrb[0].mxu0
    %1213 = vmatprep.mubr.f32.mxu0 0.0
    %1214 = vmatmul.mubr.f32.gmra.mrb[0].mxu0 %v522
    %v1215 = vpop.f32.mrb[0].mxu0
    %v1216 = vadd.f32 0.0, %v1215
    %v1217 = vpop.f32.mrb[0].mxu0
    %1218 = vmatprep.mubr.f32.mxu0 0.0
    %1219 = vmatmul.mubr.f32.gmra.mrb[0].mxu0 %v525
    %v1220 = vpop.f32.mrb[0].mxu0
    %v1221 = vadd.f32 0.0, %v1220
    %v1222 = vpop.f32.mrb[0].mxu0
    %1223 = vmatprep.mubr.f32.mxu0 0.0
    %1224 = vmatmul.mubr.f32.gmra.mrb[0].mxu0 %v528
    %v1225 = vpop.f32.mrb[0].mxu0
    %v1226 = vadd.f32 0.0, %v1225
    %v1227 = vpop.f32.mrb[0].mxu0
    %1228 = vmatprep.mubr.f32.mxu0 0.0
    %1229 = vmatmul.mubr.f32.gmra.mrb[0].mxu0 %v531
    %v1230 = vpop.f32.mrb[0].mxu0
    %v1231 = vadd.f32 0.0, %v1230
    %v1232 = vpop.f32.mrb[0].mxu0
    %1233 = vmatprep.mubr.f32.mxu0 0.0
    %1234 = vmatmul.mubr.f32.gmra.mrb[0].mxu0 %v534
    %v1235 = vpop.f32.mrb[0].mxu0
    %v1236 = vadd.f32 0.0, %v1235
    %v1237 = vpop.f32.mrb[0].mxu0
    %1238 = vmatprep.mubr.f32.mxu0 0.0
    %1239 = vmatmul.mubr.f32.gmra.mrb[0].mxu0 %v537
    %v1240 = vpop.f32.mrb[0].mxu0
    %v1241 = vadd.f32 0.0, %v1240
    %v1242 = vpop.f32.mrb[0].mxu0
    %1243 = vdwg.mxu0
    %vm1244 = vcmask 64512
    %v1245 = vsel %vm1244, %v606, 0.0
    %v1246 = vsel %vm1244, %v626, 0.0
    %v1247 = vadd.f32 %v1245, %v1246
    %v1248 = vsel %vm1244, %v646, 0.0
    %v1249 = vadd.f32 %v1247, %v1248
    %v1250 = vsel %vm1244, %v666, 0.0
    %v1251 = vadd.f32 %v1249, %v1250
    %v1252 = vsel %vm1244, %v686, 0.0
    %v1253 = vadd.f32 %v1251, %v1252
    %v1254 = vsel %vm1244, %v706, 0.0
    %v1255 = vadd.f32 %v1253, %v1254
    %v1256 = vsel %vm1244, %v726, 0.0
    %v1257 = vadd.f32 %v1255, %v1256
    %v1258 = vsel %vm1244, %v746, 0.0
    %v1259 = vadd.f32 %v1257, %v1258
    %v1260 = vsel %vm1244, %v766, 0.0
    %v1261 = vadd.f32 %v1259, %v1260
    %v1262 = vsel %vm1244, %v786, 0.0
    %v1263 = vadd.f32 %v1261, %v1262
    %v1264 = vsel %vm1244, %v806, 0.0
    %v1265 = vadd.f32 %v1263, %v1264
    %v1266 = vsel %vm1244, %v826, 0.0
    %v1267 = vadd.f32 %v1265, %v1266
    %v1268 = vsel %vm1244, %v846, 0.0
    %v1269 = vadd.f32 %v1267, %v1268
    %v1270 = vsel %vm1244, %v866, 0.0
    %v1271 = vadd.f32 %v1269, %v1270
    %v1272 = vsel %vm1244, %v886, 0.0
    %v1273 = vadd.f32 %v1271, %v1272
    %v1274 = vsel %vm1244, %v906, 0.0
    %v1275 = vadd.f32 %v1273, %v1274
    %v1276 = vsel %vm1244, %v611, 0.0
    %v1277 = vsel %vm1244, %v631, 0.0
    %v1278 = vadd.f32 %v1276, %v1277
    %v1279 = vsel %vm1244, %v651, 0.0
    %v1280 = vadd.f32 %v1278, %v1279
    %v1281 = vsel %vm1244, %v671, 0.0
    %v1282 = vadd.f32 %v1280, %v1281
    %v1283 = vsel %vm1244, %v691, 0.0
    %v1284 = vadd.f32 %v1282, %v1283
    %v1285 = vsel %vm1244, %v711, 0.0
    %v1286 = vadd.f32 %v1284, %v1285
    %v1287 = vsel %vm1244, %v731, 0.0
    %v1288 = vadd.f32 %v1286, %v1287
    %v1289 = vsel %vm1244, %v751, 0.0
    %v1290 = vadd.f32 %v1288, %v1289
    %v1291 = vsel %vm1244, %v771, 0.0
    %v1292 = vadd.f32 %v1290, %v1291
    %v1293 = vsel %vm1244, %v791, 0.0
    %v1294 = vadd.f32 %v1292, %v1293
    %v1295 = vsel %vm1244, %v811, 0.0
    %v1296 = vadd.f32 %v1294, %v1295
    %v1297 = vsel %vm1244, %v831, 0.0
    %v1298 = vadd.f32 %v1296, %v1297
    %v1299 = vsel %vm1244, %v851, 0.0
    %v1300 = vadd.f32 %v1298, %v1299
    %v1301 = vsel %vm1244, %v871, 0.0
    %v1302 = vadd.f32 %v1300, %v1301
    %v1303 = vsel %vm1244, %v891, 0.0
    %v1304 = vadd.f32 %v1302, %v1303
    %v1305 = vsel %vm1244, %v911, 0.0
    %v1306 = vadd.f32 %v1304, %v1305
    %v1307 = vsel %vm1244, %v616, 0.0
    %v1308 = vsel %vm1244, %v636, 0.0
    %v1309 = vadd.f32 %v1307, %v1308
    %v1310 = vsel %vm1244, %v656, 0.0
    %v1311 = vadd.f32 %v1309, %v1310
    %v1312 = vsel %vm1244, %v676, 0.0
    %v1313 = vadd.f32 %v1311, %v1312
    %v1314 = vsel %vm1244, %v696, 0.0
    %v1315 = vadd.f32 %v1313, %v1314
    %v1316 = vsel %vm1244, %v716, 0.0
    %v1317 = vadd.f32 %v1315, %v1316
    %v1318 = vsel %vm1244, %v736, 0.0
    %v1319 = vadd.f32 %v1317, %v1318
    %v1320 = vsel %vm1244, %v756, 0.0
    %v1321 = vadd.f32 %v1319, %v1320
    %v1322 = vsel %vm1244, %v776, 0.0
    %v1323 = vadd.f32 %v1321, %v1322
    %v1324 = vsel %vm1244, %v796, 0.0
    %v1325 = vadd.f32 %v1323, %v1324
    %v1326 = vsel %vm1244, %v816, 0.0
    %v1327 = vadd.f32 %v1325, %v1326
    %v1328 = vsel %vm1244, %v836, 0.0
    %v1329 = vadd.f32 %v1327, %v1328
    %v1330 = vsel %vm1244, %v856, 0.0
    %v1331 = vadd.f32 %v1329, %v1330
    %v1332 = vsel %vm1244, %v876, 0.0
    %v1333 = vadd.f32 %v1331, %v1332
    %v1334 = vsel %vm1244, %v896, 0.0
    %v1335 = vadd.f32 %v1333, %v1334
    %v1336 = vsel %vm1244, %v916, 0.0
    %v1337 = vadd.f32 %v1335, %v1336
    %v1338 = vsel %vm1244, %v621, 0.0
    %v1339 = vsel %vm1244, %v641, 0.0
    %v1340 = vadd.f32 %v1338, %v1339
    %v1341 = vsel %vm1244, %v661, 0.0
    %v1342 = vadd.f32 %v1340, %v1341
    %v1343 = vsel %vm1244, %v681, 0.0
    %v1344 = vadd.f32 %v1342, %v1343
    %v1345 = vsel %vm1244, %v701, 0.0
    %v1346 = vadd.f32 %v1344, %v1345
    %v1347 = vsel %vm1244, %v721, 0.0
    %v1348 = vadd.f32 %v1346, %v1347
    %v1349 = vsel %vm1244, %v741, 0.0
    %v1350 = vadd.f32 %v1348, %v1349
    %v1351 = vsel %vm1244, %v761, 0.0
    %v1352 = vadd.f32 %v1350, %v1351
    %v1353 = vsel %vm1244, %v781, 0.0
    %v1354 = vadd.f32 %v1352, %v1353
    %v1355 = vsel %vm1244, %v801, 0.0
    %v1356 = vadd.f32 %v1354, %v1355
    %v1357 = vsel %vm1244, %v821, 0.0
    %v1358 = vadd.f32 %v1356, %v1357
    %v1359 = vsel %vm1244, %v841, 0.0
    %v1360 = vadd.f32 %v1358, %v1359
    %v1361 = vsel %vm1244, %v861, 0.0
    %v1362 = vadd.f32 %v1360, %v1361
    %v1363 = vsel %vm1244, %v881, 0.0
    %v1364 = vadd.f32 %v1362, %v1363
    %v1365 = vsel %vm1244, %v901, 0.0
    %v1366 = vadd.f32 %v1364, %v1365
    %v1367 = vsel %vm1244, %v921, 0.0
    %v1368 = vadd.f32 %v1366, %v1367
    %v1369 = vrcp.pop 16.0
    %v1370 = vmul.f32 %v1275, %v1369
    %v1371 = vmul.f32 %v1306, %v1369
    %v1372 = vmul.f32 %v1337, %v1369
    %v1373 = vmul.f32 %v1368, %v1369
    %v1374 = vsub.f32 %v606, %v1370
    %v1375 = vsub.f32 %v611, %v1371
    %v1376 = vsub.f32 %v616, %v1372
    %v1377 = vsub.f32 %v621, %v1373
    %v1378 = vsub.f32 %v626, %v1370
    %v1379 = vsub.f32 %v631, %v1371
    %v1380 = vsub.f32 %v636, %v1372
    %v1381 = vsub.f32 %v641, %v1373
    %v1382 = vsub.f32 %v646, %v1370
    %v1383 = vsub.f32 %v651, %v1371
    %v1384 = vsub.f32 %v656, %v1372
    %v1385 = vsub.f32 %v661, %v1373
    %v1386 = vsub.f32 %v666, %v1370
    %v1387 = vsub.f32 %v671, %v1371
    %v1388 = vsub.f32 %v676, %v1372
    %v1389 = vsub.f32 %v681, %v1373
    %v1390 = vsub.f32 %v686, %v1370
    %v1391 = vsub.f32 %v691, %v1371
    %v1392 = vsub.f32 %v696, %v1372
    %v1393 = vsub.f32 %v701, %v1373
    %v1394 = vsub.f32 %v706, %v1370
    %v1395 = vsub.f32 %v711, %v1371
    %v1396 = vsub.f32 %v716, %v1372
    %v1397 = vsub.f32 %v721, %v1373
    %v1398 = vsub.f32 %v726, %v1370
    %v1399 = vsub.f32 %v731, %v1371
    %v1400 = vsub.f32 %v736, %v1372
    %v1401 = vsub.f32 %v741, %v1373
    %v1402 = vsub.f32 %v746, %v1370
    %v1403 = vsub.f32 %v751, %v1371
    %v1404 = vsub.f32 %v756, %v1372
    %v1405 = vsub.f32 %v761, %v1373
    %v1406 = vsub.f32 %v766, %v1370
    %v1407 = vsub.f32 %v771, %v1371
    %v1408 = vsub.f32 %v776, %v1372
    %v1409 = vsub.f32 %v781, %v1373
    %v1410 = vsub.f32 %v786, %v1370
    %v1411 = vsub.f32 %v791, %v1371
    %v1412 = vsub.f32 %v796, %v1372
    %v1413 = vsub.f32 %v801, %v1373
    %v1414 = vsub.f32 %v806, %v1370
    %v1415 = vsub.f32 %v811, %v1371
    %v1416 = vsub.f32 %v816, %v1372
    %v1417 = vsub.f32 %v821, %v1373
    %v1418 = vsub.f32 %v826, %v1370
    %v1419 = vsub.f32 %v831, %v1371
    %v1420 = vsub.f32 %v836, %v1372
    %v1421 = vsub.f32 %v841, %v1373
    %v1422 = vsub.f32 %v846, %v1370
    %v1423 = vsub.f32 %v851, %v1371
    %v1424 = vsub.f32 %v856, %v1372
    %v1425 = vsub.f32 %v861, %v1373
    %v1426 = vsub.f32 %v866, %v1370
    %v1427 = vsub.f32 %v871, %v1371
    %v1428 = vsub.f32 %v876, %v1372
    %v1429 = vsub.f32 %v881, %v1373
    %v1430 = vsub.f32 %v886, %v1370
    %v1431 = vsub.f32 %v891, %v1371
    %v1432 = vsub.f32 %v896, %v1372
    %v1433 = vsub.f32 %v901, %v1373
    %v1434 = vsub.f32 %v906, %v1370
    %v1435 = vsub.f32 %v911, %v1371
    %v1436 = vsub.f32 %v916, %v1372
    %v1437 = vsub.f32 %v921, %v1373
    %v1438 = vmul.f32 %v1374, %v1374
    %v1439 = vmul.f32 %v1375, %v1375
    %v1440 = vmul.f32 %v1376, %v1376
    %v1441 = vmul.f32 %v1377, %v1377
    %v1442 = vmul.f32 %v1378, %v1378
    %v1443 = vmul.f32 %v1379, %v1379
    %v1444 = vmul.f32 %v1380, %v1380
    %v1445 = vmul.f32 %v1381, %v1381
    %v1446 = vmul.f32 %v1382, %v1382
    %v1447 = vmul.f32 %v1383, %v1383
    %v1448 = vmul.f32 %v1384, %v1384
    %v1449 = vmul.f32 %v1385, %v1385
    %v1450 = vmul.f32 %v1386, %v1386
    %v1451 = vmul.f32 %v1387, %v1387
    %v1452 = vmul.f32 %v1388, %v1388
    %v1453 = vmul.f32 %v1389, %v1389
    %v1454 = vmul.f32 %v1390, %v1390
    %v1455 = vmul.f32 %v1391, %v1391
    %v1456 = vmul.f32 %v1392, %v1392
    %v1457 = vmul.f32 %v1393, %v1393
    %v1458 = vmul.f32 %v1394, %v1394
    %v1459 = vmul.f32 %v1395, %v1395
    %v1460 = vmul.f32 %v1396, %v1396
    %v1461 = vmul.f32 %v1397, %v1397
    %v1462 = vmul.f32 %v1398, %v1398
    %v1463 = vmul.f32 %v1399, %v1399
    %v1464 = vmul.f32 %v1400, %v1400
    %v1465 = vmul.f32 %v1401, %v1401
    %v1466 = vmul.f32 %v1402, %v1402
    %v1467 = vmul.f32 %v1403, %v1403
    %v1468 = vmul.f32 %v1404, %v1404
    %v1469 = vmul.f32 %v1405, %v1405
    %v1470 = vmul.f32 %v1406, %v1406
    %v1471 = vmul.f32 %v1407, %v1407
    %v1472 = vmul.f32 %v1408, %v1408
    %v1473 = vmul.f32 %v1409, %v1409
    %v1474 = vmul.f32 %v1410, %v1410
    %v1475 = vmul.f32 %v1411, %v1411
    %v1476 = vmul.f32 %v1412, %v1412
    %v1477 = vmul.f32 %v1413, %v1413
    %v1478 = vmul.f32 %v1414, %v1414
    %v1479 = vmul.f32 %v1415, %v1415
    %v1480 = vmul.f32 %v1416, %v1416
    %v1481 = vmul.f32 %v1417, %v1417
    %v1482 = vmul.f32 %v1418, %v1418
    %v1483 = vmul.f32 %v1419, %v1419
    %v1484 = vmul.f32 %v1420, %v1420
    %v1485 = vmul.f32 %v1421, %v1421
    %v1486 = vmul.f32 %v1422, %v1422
    %v1487 = vmul.f32 %v1423, %v1423
    %v1488 = vmul.f32 %v1424, %v1424
    %v1489 = vmul.f32 %v1425, %v1425
    %v1490 = vmul.f32 %v1426, %v1426
    %v1491 = vmul.f32 %v1427, %v1427
    %v1492 = vmul.f32 %v1428, %v1428
    %v1493 = vmul.f32 %v1429, %v1429
    %v1494 = vmul.f32 %v1430, %v1430
    %v1495 = vmul.f32 %v1431, %v1431
    %v1496 = vmul.f32 %v1432, %v1432
    %v1497 = vmul.f32 %v1433, %v1433
    %v1498 = vmul.f32 %v1434, %v1434
    %v1499 = vmul.f32 %v1435, %v1435
    %v1500 = vmul.f32 %v1436, %v1436
    %v1501 = vmul.f32 %v1437, %v1437
    %v1502 = vsel %vm1244, %v1438, 0.0
    %v1503 = vsel %vm1244, %v1442, 0.0
    %v1504 = vadd.f32 %v1502, %v1503
    %v1505 = vsel %vm1244, %v1446, 0.0
    %v1506 = vadd.f32 %v1504, %v1505
    %v1507 = vsel %vm1244, %v1450, 0.0
    %v1508 = vadd.f32 %v1506, %v1507
    %v1509 = vsel %vm1244, %v1454, 0.0
    %v1510 = vadd.f32 %v1508, %v1509
    %v1511 = vsel %vm1244, %v1458, 0.0
    %v1512 = vadd.f32 %v1510, %v1511
    %v1513 = vsel %vm1244, %v1462, 0.0
    %v1514 = vadd.f32 %v1512, %v1513
    %v1515 = vsel %vm1244, %v1466, 0.0
    %v1516 = vadd.f32 %v1514, %v1515
    %v1517 = vsel %vm1244, %v1470, 0.0
    %v1518 = vadd.f32 %v1516, %v1517
    %v1519 = vsel %vm1244, %v1474, 0.0
    %v1520 = vadd.f32 %v1518, %v1519
    %v1521 = vsel %vm1244, %v1478, 0.0
    %v1522 = vadd.f32 %v1520, %v1521
    %v1523 = vsel %vm1244, %v1482, 0.0
    %v1524 = vadd.f32 %v1522, %v1523
    %v1525 = vsel %vm1244, %v1486, 0.0
    %v1526 = vadd.f32 %v1524, %v1525
    %v1527 = vsel %vm1244, %v1490, 0.0
    %v1528 = vadd.f32 %v1526, %v1527
    %v1529 = vsel %vm1244, %v1494, 0.0
    %v1530 = vadd.f32 %v1528, %v1529
    %v1531 = vsel %vm1244, %v1498, 0.0
    %v1532 = vadd.f32 %v1530, %v1531
    %v1533 = vsel %vm1244, %v1439, 0.0
    %v1534 = vsel %vm1244, %v1443, 0.0
    %v1535 = vadd.f32 %v1533, %v1534
    %v1536 = vsel %vm1244, %v1447, 0.0
    %v1537 = vadd.f32 %v1535, %v1536
    %v1538 = vsel %vm1244, %v1451, 0.0
    %v1539 = vadd.f32 %v1537, %v1538
    %v1540 = vsel %vm1244, %v1455, 0.0
    %v1541 = vadd.f32 %v1539, %v1540
    %v1542 = vsel %vm1244, %v1459, 0.0
    %v1543 = vadd.f32 %v1541, %v1542
    %v1544 = vsel %vm1244, %v1463, 0.0
    %v1545 = vadd.f32 %v1543, %v1544
    %v1546 = vsel %vm1244, %v1467, 0.0
    %v1547 = vadd.f32 %v1545, %v1546
    %v1548 = vsel %vm1244, %v1471, 0.0
    %v1549 = vadd.f32 %v1547, %v1548
    %v1550 = vsel %vm1244, %v1475, 0.0
    %v1551 = vadd.f32 %v1549, %v1550
    %v1552 = vsel %vm1244, %v1479, 0.0
    %v1553 = vadd.f32 %v1551, %v1552
    %v1554 = vsel %vm1244, %v1483, 0.0
    %v1555 = vadd.f32 %v1553, %v1554
    %v1556 = vsel %vm1244, %v1487, 0.0
    %v1557 = vadd.f32 %v1555, %v1556
    %v1558 = vsel %vm1244, %v1491, 0.0
    %v1559 = vadd.f32 %v1557, %v1558
    %v1560 = vsel %vm1244, %v1495, 0.0
    %v1561 = vadd.f32 %v1559, %v1560
    %v1562 = vsel %vm1244, %v1499, 0.0
    %v1563 = vadd.f32 %v1561, %v1562
    %v1564 = vsel %vm1244, %v1440, 0.0
    %v1565 = vsel %vm1244, %v1444, 0.0
    %v1566 = vadd.f32 %v1564, %v1565
    %v1567 = vsel %vm1244, %v1448, 0.0
    %v1568 = vadd.f32 %v1566, %v1567
    %v1569 = vsel %vm1244, %v1452, 0.0
    %v1570 = vadd.f32 %v1568, %v1569
    %v1571 = vsel %vm1244, %v1456, 0.0
    %v1572 = vadd.f32 %v1570, %v1571
    %v1573 = vsel %vm1244, %v1460, 0.0
    %v1574 = vadd.f32 %v1572, %v1573
    %v1575 = vsel %vm1244, %v1464, 0.0
    %v1576 = vadd.f32 %v1574, %v1575
    %v1577 = vsel %vm1244, %v1468, 0.0
    %v1578 = vadd.f32 %v1576, %v1577
    %v1579 = vsel %vm1244, %v1472, 0.0
    %v1580 = vadd.f32 %v1578, %v1579
    %v1581 = vsel %vm1244, %v1476, 0.0
    %v1582 = vadd.f32 %v1580, %v1581
    %v1583 = vsel %vm1244, %v1480, 0.0
    %v1584 = vadd.f32 %v1582, %v1583
    %v1585 = vsel %vm1244, %v1484, 0.0
    %v1586 = vadd.f32 %v1584, %v1585
    %v1587 = vsel %vm1244, %v1488, 0.0
    %v1588 = vadd.f32 %v1586, %v1587
    %v1589 = vsel %vm1244, %v1492, 0.0
    %v1590 = vadd.f32 %v1588, %v1589
    %v1591 = vsel %vm1244, %v1496, 0.0
    %v1592 = vadd.f32 %v1590, %v1591
    %v1593 = vsel %vm1244, %v1500, 0.0
    %v1594 = vadd.f32 %v1592, %v1593
    %v1595 = vsel %vm1244, %v1441, 0.0
    %v1596 = vsel %vm1244, %v1445, 0.0
    %v1597 = vadd.f32 %v1595, %v1596
    %v1598 = vsel %vm1244, %v1449, 0.0
    %v1599 = vadd.f32 %v1597, %v1598
    %v1600 = vsel %vm1244, %v1453, 0.0
    %v1601 = vadd.f32 %v1599, %v1600
    %v1602 = vsel %vm1244, %v1457, 0.0
    %v1603 = vadd.f32 %v1601, %v1602
    %v1604 = vsel %vm1244, %v1461, 0.0
    %v1605 = vadd.f32 %v1603, %v1604
    %v1606 = vsel %vm1244, %v1465, 0.0
    %v1607 = vadd.f32 %v1605, %v1606
    %v1608 = vsel %vm1244, %v1469, 0.0
    %v1609 = vadd.f32 %v1607, %v1608
    %v1610 = vsel %vm1244, %v1473, 0.0
    %v1611 = vadd.f32 %v1609, %v1610
    %v1612 = vsel %vm1244, %v1477, 0.0
    %v1613 = vadd.f32 %v1611, %v1612
    %v1614 = vsel %vm1244, %v1481, 0.0
    %v1615 = vadd.f32 %v1613, %v1614
    %v1616 = vsel %vm1244, %v1485, 0.0
    %v1617 = vadd.f32 %v1615, %v1616
    %v1618 = vsel %vm1244, %v1489, 0.0
    %v1619 = vadd.f32 %v1617, %v1618
    %v1620 = vsel %vm1244, %v1493, 0.0
    %v1621 = vadd.f32 %v1619, %v1620
    %v1622 = vsel %vm1244, %v1497, 0.0
    %v1623 = vadd.f32 %v1621, %v1622
    %v1624 = vsel %vm1244, %v1501, 0.0
    %v1625 = vadd.f32 %v1623, %v1624
    %v1626 = vmul.f32 %v1532, %v1369
    %v1627 = vmul.f32 %v1563, %v1369
    %v1628 = vmul.f32 %v1594, %v1369
    %v1629 = vmul.f32 %v1625, %v1369
    %v1630 = vadd.f32 %v1626, 1e-05
    %v1631 = vadd.f32 %v1627, 1e-05
    %v1632 = vadd.f32 %v1628, 1e-05
    %v1633 = vadd.f32 %v1629, 1e-05
    %v1634 = vrsqrt.pop %v1630
    %v1635 = vrsqrt.pop %v1631
    %v1636 = vrsqrt.pop %v1632
    %v1637 = vrsqrt.pop %v1633
    %v1638 = vmul.f32 %v1374, %v1634
    %v1639 = vmul.f32 %v1375, %v1635
    %v1640 = vmul.f32 %v1376, %v1636
    %v1641 = vmul.f32 %v1377, %v1637
    %v1642 = vmul.f32 %v1378, %v1634
    %v1643 = vmul.f32 %v1379, %v1635
    %v1644 = vmul.f32 %v1380, %v1636
    %v1645 = vmul.f32 %v1381, %v1637
    %v1646 = vmul.f32 %v1382, %v1634
    %v1647 = vmul.f32 %v1383, %v1635
    %v1648 = vmul.f32 %v1384, %v1636
    %v1649 = vmul.f32 %v1385, %v1637
    %v1650 = vmul.f32 %v1386, %v1634
    %v1651 = vmul.f32 %v1387, %v1635
    %v1652 = vmul.f32 %v1388, %v1636
    %v1653 = vmul.f32 %v1389, %v1637
    %v1654 = vmul.f32 %v1390, %v1634
    %v1655 = vmul.f32 %v1391, %v1635
    %v1656 = vmul.f32 %v1392, %v1636
    %v1657 = vmul.f32 %v1393, %v1637
    %v1658 = vmul.f32 %v1394, %v1634
    %v1659 = vmul.f32 %v1395, %v1635
    %v1660 = vmul.f32 %v1396, %v1636
    %v1661 = vmul.f32 %v1397, %v1637
    %v1662 = vmul.f32 %v1398, %v1634
    %v1663 = vmul.f32 %v1399, %v1635
    %v1664 = vmul.f32 %v1400, %v1636
    %v1665 = vmul.f32 %v1401, %v1637
    %v1666 = vmul.f32 %v1402, %v1634
    %v1667 = vmul.f32 %v1403, %v1635
    %v1668 = vmul.f32 %v1404, %v1636
    %v1669 = vmul.f32 %v1405, %v1637
    %v1670 = vmul.f32 %v1406, %v1634
    %v1671 = vmul.f32 %v1407, %v1635
    %v1672 = vmul.f32 %v1408, %v1636
    %v1673 = vmul.f32 %v1409, %v1637
    %v1674 = vmul.f32 %v1410, %v1634
    %v1675 = vmul.f32 %v1411, %v1635
    %v1676 = vmul.f32 %v1412, %v1636
    %v1677 = vmul.f32 %v1413, %v1637
    %v1678 = vmul.f32 %v1414, %v1634
    %v1679 = vmul.f32 %v1415, %v1635
    %v1680 = vmul.f32 %v1416, %v1636
    %v1681 = vmul.f32 %v1417, %v1637
    %v1682 = vmul.f32 %v1418, %v1634
    %v1683 = vmul.f32 %v1419, %v1635
    %v1684 = vmul.f32 %v1420, %v1636
    %v1685 = vmul.f32 %v1421, %v1637
    %v1686 = vmul.f32 %v1422, %v1634
    %v1687 = vmul.f32 %v1423, %v1635
    %v1688 = vmul.f32 %v1424, %v1636
    %v1689 = vmul.f32 %v1425, %v1637
    %v1690 = vmul.f32 %v1426, %v1634
    %v1691 = vmul.f32 %v1427, %v1635
    %v1692 = vmul.f32 %v1428, %v1636
    %v1693 = vmul.f32 %v1429, %v1637
    %v1694 = vmul.f32 %v1430, %v1634
    %v1695 = vmul.f32 %v1431, %v1635
    %v1696 = vmul.f32 %v1432, %v1636
    %v1697 = vmul.f32 %v1433, %v1637
    %v1698 = vmul.f32 %v1434, %v1634
    %v1699 = vmul.f32 %v1435, %v1635
    %v1700 = vmul.f32 %v1436, %v1636
    %v1701 = vmul.f32 %v1437, %v1637
    %v1702 = vmul.f32 %v1638, 0.1
    %v1703 = vmul.f32 %v1639, 0.1
    %v1704 = vmul.f32 %v1640, 0.1
    %v1705 = vmul.f32 %v1641, 0.1
    %v1706 = vmul.f32 %v1642, 0.1
    %v1707 = vmul.f32 %v1643, 0.1
    %v1708 = vmul.f32 %v1644, 0.1
    %v1709 = vmul.f32 %v1645, 0.1
    %v1710 = vmul.f32 %v1646, 0.1
    %v1711 = vmul.f32 %v1647, 0.1
    %v1712 = vmul.f32 %v1648, 0.1
    %v1713 = vmul.f32 %v1649, 0.1
    %v1714 = vmul.f32 %v1650, 0.1
    %v1715 = vmul.f32 %v1651, 0.1
    %v1716 = vmul.f32 %v1652, 0.1
    %v1717 = vmul.f32 %v1653, 0.1
    %v1718 = vmul.f32 %v1654, 0.1
    %v1719 = vmul.f32 %v1655, 0.1
    %v1720 = vmul.f32 %v1656, 0.1
    %v1721 = vmul.f32 %v1657, 0.1
    %v1722 = vmul.f32 %v1658, 0.1
    %v1723 = vmul.f32 %v1659, 0.1
    %v1724 = vmul.f32 %v1660, 0.1
    %v1725 = vmul.f32 %v1661, 0.1
    %v1726 = vmul.f32 %v1662, 0.1
    %v1727 = vmul.f32 %v1663, 0.1
    %v1728 = vmul.f32 %v1664, 0.1
    %v1729 = vmul.f32 %v1665, 0.1
    %v1730 = vmul.f32 %v1666, 0.1
    %v1731 = vmul.f32 %v1667, 0.1
    %v1732 = vmul.f32 %v1668, 0.1
    %v1733 = vmul.f32 %v1669, 0.1
    %v1734 = vmul.f32 %v1670, 0.1
    %v1735 = vmul.f32 %v1671, 0.1
    %v1736 = vmul.f32 %v1672, 0.1
    %v1737 = vmul.f32 %v1673, 0.1
    %v1738 = vmul.f32 %v1674, 0.1
    %v1739 = vmul.f32 %v1675, 0.1
    %v1740 = vmul.f32 %v1676, 0.1
    %v1741 = vmul.f32 %v1677, 0.1
    %v1742 = vmul.f32 %v1678, 0.1
    %v1743 = vmul.f32 %v1679, 0.1
    %v1744 = vmul.f32 %v1680, 0.1
    %v1745 = vmul.f32 %v1681, 0.1
    %v1746 = vmul.f32 %v1682, 0.1
    %v1747 = vmul.f32 %v1683, 0.1
    %v1748 = vmul.f32 %v1684, 0.1
    %v1749 = vmul.f32 %v1685, 0.1
    %v1750 = vmul.f32 %v1686, 0.1
    %v1751 = vmul.f32 %v1687, 0.1
    %v1752 = vmul.f32 %v1688, 0.1
    %v1753 = vmul.f32 %v1689, 0.1
    %v1754 = vmul.f32 %v1690, 0.1
    %v1755 = vmul.f32 %v1691, 0.1
    %v1756 = vmul.f32 %v1692, 0.1
    %v1757 = vmul.f32 %v1693, 0.1
    %v1758 = vmul.f32 %v1694, 0.1
    %v1759 = vmul.f32 %v1695, 0.1
    %v1760 = vmul.f32 %v1696, 0.1
    %v1761 = vmul.f32 %v1697, 0.1
    %v1762 = vmul.f32 %v1698, 0.1
    %v1763 = vmul.f32 %v1699, 0.1
    %v1764 = vmul.f32 %v1700, 0.1
    %v1765 = vmul.f32 %v1701, 0.1
    %v1766 = vmax.f32 %v1638, %v1702
    %v1767 = vmax.f32 %v1639, %v1703
    %v1768 = vmax.f32 %v1640, %v1704
    %v1769 = vmax.f32 %v1641, %v1705
    %v1770 = vmax.f32 %v1642, %v1706
    %v1771 = vmax.f32 %v1643, %v1707
    %v1772 = vmax.f32 %v1644, %v1708
    %v1773 = vmax.f32 %v1645, %v1709
    %v1774 = vmax.f32 %v1646, %v1710
    %v1775 = vmax.f32 %v1647, %v1711
    %v1776 = vmax.f32 %v1648, %v1712
    %v1777 = vmax.f32 %v1649, %v1713
    %v1778 = vmax.f32 %v1650, %v1714
    %v1779 = vmax.f32 %v1651, %v1715
    %v1780 = vmax.f32 %v1652, %v1716
    %v1781 = vmax.f32 %v1653, %v1717
    %v1782 = vmax.f32 %v1654, %v1718
    %v1783 = vmax.f32 %v1655, %v1719
    %v1784 = vmax.f32 %v1656, %v1720
    %v1785 = vmax.f32 %v1657, %v1721
    %v1786 = vmax.f32 %v1658, %v1722
    %v1787 = vmax.f32 %v1659, %v1723
    %v1788 = vmax.f32 %v1660, %v1724
    %v1789 = vmax.f32 %v1661, %v1725
    %v1790 = vmax.f32 %v1662, %v1726
    %v1791 = vmax.f32 %v1663, %v1727
    %v1792 = vmax.f32 %v1664, %v1728
    %v1793 = vmax.f32 %v1665, %v1729
    %v1794 = vmax.f32 %v1666, %v1730
    %v1795 = vmax.f32 %v1667, %v1731
    %v1796 = vmax.f32 %v1668, %v1732
    %v1797 = vmax.f32 %v1669, %v1733
    %v1798 = vmax.f32 %v1670, %v1734
    %v1799 = vmax.f32 %v1671, %v1735
    %v1800 = vmax.f32 %v1672, %v1736
    %v1801 = vmax.f32 %v1673, %v1737
    %v1802 = vmax.f32 %v1674, %v1738
    %v1803 = vmax.f32 %v1675, %v1739
    %v1804 = vmax.f32 %v1676, %v1740
    %v1805 = vmax.f32 %v1677, %v1741
    %v1806 = vmax.f32 %v1678, %v1742
    %v1807 = vmax.f32 %v1679, %v1743
    %v1808 = vmax.f32 %v1680, %v1744
    %v1809 = vmax.f32 %v1681, %v1745
    %v1810 = vmax.f32 %v1682, %v1746
    %v1811 = vmax.f32 %v1683, %v1747
    %v1812 = vmax.f32 %v1684, %v1748
    %v1813 = vmax.f32 %v1685, %v1749
    %v1814 = vmax.f32 %v1686, %v1750
    %v1815 = vmax.f32 %v1687, %v1751
    %v1816 = vmax.f32 %v1688, %v1752
    %v1817 = vmax.f32 %v1689, %v1753
    %v1818 = vmax.f32 %v1690, %v1754
    %v1819 = vmax.f32 %v1691, %v1755
    %v1820 = vmax.f32 %v1692, %v1756
    %v1821 = vmax.f32 %v1693, %v1757
    %v1822 = vmax.f32 %v1694, %v1758
    %v1823 = vmax.f32 %v1695, %v1759
    %v1824 = vmax.f32 %v1696, %v1760
    %v1825 = vmax.f32 %v1697, %v1761
    %v1826 = vmax.f32 %v1698, %v1762
    %v1827 = vmax.f32 %v1699, %v1763
    %v1828 = vmax.f32 %v1700, %v1764
    %v1829 = vmax.f32 %v1701, %v1765
    %v1830 = vsel %vm1244, %v926, 0.0
    %v1831 = vsel %vm1244, %v946, 0.0
    %v1832 = vadd.f32 %v1830, %v1831
    %v1833 = vsel %vm1244, %v966, 0.0
    %v1834 = vadd.f32 %v1832, %v1833
    %v1835 = vsel %vm1244, %v986, 0.0
    %v1836 = vadd.f32 %v1834, %v1835
    %v1837 = vsel %vm1244, %v1006, 0.0
    %v1838 = vadd.f32 %v1836, %v1837
    %v1839 = vsel %vm1244, %v1026, 0.0
    %v1840 = vadd.f32 %v1838, %v1839
    %v1841 = vsel %vm1244, %v1046, 0.0
    %v1842 = vadd.f32 %v1840, %v1841
    %v1843 = vsel %vm1244, %v1066, 0.0
    %v1844 = vadd.f32 %v1842, %v1843
    %v1845 = vsel %vm1244, %v1086, 0.0
    %v1846 = vadd.f32 %v1844, %v1845
    %v1847 = vsel %vm1244, %v1106, 0.0
    %v1848 = vadd.f32 %v1846, %v1847
    %v1849 = vsel %vm1244, %v1126, 0.0
    %v1850 = vadd.f32 %v1848, %v1849
    %v1851 = vsel %vm1244, %v1146, 0.0
    %v1852 = vadd.f32 %v1850, %v1851
    %v1853 = vsel %vm1244, %v1166, 0.0
    %v1854 = vadd.f32 %v1852, %v1853
    %v1855 = vsel %vm1244, %v1186, 0.0
    %v1856 = vadd.f32 %v1854, %v1855
    %v1857 = vsel %vm1244, %v1206, 0.0
    %v1858 = vadd.f32 %v1856, %v1857
    %v1859 = vsel %vm1244, %v1226, 0.0
    %v1860 = vadd.f32 %v1858, %v1859
    %v1861 = vsel %vm1244, %v931, 0.0
    %v1862 = vsel %vm1244, %v951, 0.0
    %v1863 = vadd.f32 %v1861, %v1862
    %v1864 = vsel %vm1244, %v971, 0.0
    %v1865 = vadd.f32 %v1863, %v1864
    %v1866 = vsel %vm1244, %v991, 0.0
    %v1867 = vadd.f32 %v1865, %v1866
    %v1868 = vsel %vm1244, %v1011, 0.0
    %v1869 = vadd.f32 %v1867, %v1868
    %v1870 = vsel %vm1244, %v1031, 0.0
    %v1871 = vadd.f32 %v1869, %v1870
    %v1872 = vsel %vm1244, %v1051, 0.0
    %v1873 = vadd.f32 %v1871, %v1872
    %v1874 = vsel %vm1244, %v1071, 0.0
    %v1875 = vadd.f32 %v1873, %v1874
    %v1876 = vsel %vm1244, %v1091, 0.0
    %v1877 = vadd.f32 %v1875, %v1876
    %v1878 = vsel %vm1244, %v1111, 0.0
    %v1879 = vadd.f32 %v1877, %v1878
    %v1880 = vsel %vm1244, %v1131, 0.0
    %v1881 = vadd.f32 %v1879, %v1880
    %v1882 = vsel %vm1244, %v1151, 0.0
    %v1883 = vadd.f32 %v1881, %v1882
    %v1884 = vsel %vm1244, %v1171, 0.0
    %v1885 = vadd.f32 %v1883, %v1884
    %v1886 = vsel %vm1244, %v1191, 0.0
    %v1887 = vadd.f32 %v1885, %v1886
    %v1888 = vsel %vm1244, %v1211, 0.0
    %v1889 = vadd.f32 %v1887, %v1888
    %v1890 = vsel %vm1244, %v1231, 0.0
    %v1891 = vadd.f32 %v1889, %v1890
    %v1892 = vsel %vm1244, %v936, 0.0
    %v1893 = vsel %vm1244, %v956, 0.0
    %v1894 = vadd.f32 %v1892, %v1893
    %v1895 = vsel %vm1244, %v976, 0.0
    %v1896 = vadd.f32 %v1894, %v1895
    %v1897 = vsel %vm1244, %v996, 0.0
    %v1898 = vadd.f32 %v1896, %v1897
    %v1899 = vsel %vm1244, %v1016, 0.0
    %v1900 = vadd.f32 %v1898, %v1899
    %v1901 = vsel %vm1244, %v1036, 0.0
    %v1902 = vadd.f32 %v1900, %v1901
    %v1903 = vsel %vm1244, %v1056, 0.0
    %v1904 = vadd.f32 %v1902, %v1903
    %v1905 = vsel %vm1244, %v1076, 0.0
    %v1906 = vadd.f32 %v1904, %v1905
    %v1907 = vsel %vm1244, %v1096, 0.0
    %v1908 = vadd.f32 %v1906, %v1907
    %v1909 = vsel %vm1244, %v1116, 0.0
    %v1910 = vadd.f32 %v1908, %v1909
    %v1911 = vsel %vm1244, %v1136, 0.0
    %v1912 = vadd.f32 %v1910, %v1911
    %v1913 = vsel %vm1244, %v1156, 0.0
    %v1914 = vadd.f32 %v1912, %v1913
    %v1915 = vsel %vm1244, %v1176, 0.0
    %v1916 = vadd.f32 %v1914, %v1915
    %v1917 = vsel %vm1244, %v1196, 0.0
    %v1918 = vadd.f32 %v1916, %v1917
    %v1919 = vsel %vm1244, %v1216, 0.0
    %v1920 = vadd.f32 %v1918, %v1919
    %v1921 = vsel %vm1244, %v1236, 0.0
    %v1922 = vadd.f32 %v1920, %v1921
    %v1923 = vsel %vm1244, %v941, 0.0
    %v1924 = vsel %vm1244, %v961, 0.0
    %v1925 = vadd.f32 %v1923, %v1924
    %v1926 = vsel %vm1244, %v981, 0.0
    %v1927 = vadd.f32 %v1925, %v1926
    %v1928 = vsel %vm1244, %v1001, 0.0
    %v1929 = vadd.f32 %v1927, %v1928
    %v1930 = vsel %vm1244, %v1021, 0.0
    %v1931 = vadd.f32 %v1929, %v1930
    %v1932 = vsel %vm1244, %v1041, 0.0
    %v1933 = vadd.f32 %v1931, %v1932
    %v1934 = vsel %vm1244, %v1061, 0.0
    %v1935 = vadd.f32 %v1933, %v1934
    %v1936 = vsel %vm1244, %v1081, 0.0
    %v1937 = vadd.f32 %v1935, %v1936
    %v1938 = vsel %vm1244, %v1101, 0.0
    %v1939 = vadd.f32 %v1937, %v1938
    %v1940 = vsel %vm1244, %v1121, 0.0
    %v1941 = vadd.f32 %v1939, %v1940
    %v1942 = vsel %vm1244, %v1141, 0.0
    %v1943 = vadd.f32 %v1941, %v1942
    %v1944 = vsel %vm1244, %v1161, 0.0
    %v1945 = vadd.f32 %v1943, %v1944
    %v1946 = vsel %vm1244, %v1181, 0.0
    %v1947 = vadd.f32 %v1945, %v1946
    %v1948 = vsel %vm1244, %v1201, 0.0
    %v1949 = vadd.f32 %v1947, %v1948
    %v1950 = vsel %vm1244, %v1221, 0.0
    %v1951 = vadd.f32 %v1949, %v1950
    %v1952 = vsel %vm1244, %v1241, 0.0
    %v1953 = vadd.f32 %v1951, %v1952
    %v1954 = vmul.f32 %v1860, %v1369
    %v1955 = vmul.f32 %v1891, %v1369
    %v1956 = vmul.f32 %v1922, %v1369
    %v1957 = vmul.f32 %v1953, %v1369
    %v1958 = vsub.f32 %v926, %v1954
    %v1959 = vsub.f32 %v931, %v1955
    %v1960 = vsub.f32 %v936, %v1956
    %v1961 = vsub.f32 %v941, %v1957
    %v1962 = vsub.f32 %v946, %v1954
    %v1963 = vsub.f32 %v951, %v1955
    %v1964 = vsub.f32 %v956, %v1956
    %v1965 = vsub.f32 %v961, %v1957
    %v1966 = vsub.f32 %v966, %v1954
    %v1967 = vsub.f32 %v971, %v1955
    %v1968 = vsub.f32 %v976, %v1956
    %v1969 = vsub.f32 %v981, %v1957
    %v1970 = vsub.f32 %v986, %v1954
    %v1971 = vsub.f32 %v991, %v1955
    %v1972 = vsub.f32 %v996, %v1956
    %v1973 = vsub.f32 %v1001, %v1957
    %v1974 = vsub.f32 %v1006, %v1954
    %v1975 = vsub.f32 %v1011, %v1955
    %v1976 = vsub.f32 %v1016, %v1956
    %v1977 = vsub.f32 %v1021, %v1957
    %v1978 = vsub.f32 %v1026, %v1954
    %v1979 = vsub.f32 %v1031, %v1955
    %v1980 = vsub.f32 %v1036, %v1956
    %v1981 = vsub.f32 %v1041, %v1957
    %v1982 = vsub.f32 %v1046, %v1954
    %v1983 = vsub.f32 %v1051, %v1955
    %v1984 = vsub.f32 %v1056, %v1956
    %v1985 = vsub.f32 %v1061, %v1957
    %v1986 = vsub.f32 %v1066, %v1954
    %v1987 = vsub.f32 %v1071, %v1955
    %v1988 = vsub.f32 %v1076, %v1956
    %v1989 = vsub.f32 %v1081, %v1957
    %v1990 = vsub.f32 %v1086, %v1954
    %v1991 = vsub.f32 %v1091, %v1955
    %v1992 = vsub.f32 %v1096, %v1956
    %v1993 = vsub.f32 %v1101, %v1957
    %v1994 = vsub.f32 %v1106, %v1954
    %v1995 = vsub.f32 %v1111, %v1955
    %v1996 = vsub.f32 %v1116, %v1956
    %v1997 = vsub.f32 %v1121, %v1957
    %v1998 = vsub.f32 %v1126, %v1954
    %v1999 = vsub.f32 %v1131, %v1955
    %v2000 = vsub.f32 %v1136, %v1956
    %v2001 = vsub.f32 %v1141, %v1957
    %v2002 = vsub.f32 %v1146, %v1954
    %v2003 = vsub.f32 %v1151, %v1955
    %v2004 = vsub.f32 %v1156, %v1956
    %v2005 = vsub.f32 %v1161, %v1957
    %v2006 = vsub.f32 %v1166, %v1954
    %v2007 = vsub.f32 %v1171, %v1955
    %v2008 = vsub.f32 %v1176, %v1956
    %v2009 = vsub.f32 %v1181, %v1957
    %v2010 = vsub.f32 %v1186, %v1954
    %v2011 = vsub.f32 %v1191, %v1955
    %v2012 = vsub.f32 %v1196, %v1956
    %v2013 = vsub.f32 %v1201, %v1957
    %v2014 = vsub.f32 %v1206, %v1954
    %v2015 = vsub.f32 %v1211, %v1955
    %v2016 = vsub.f32 %v1216, %v1956
    %v2017 = vsub.f32 %v1221, %v1957
    %v2018 = vsub.f32 %v1226, %v1954
    %v2019 = vsub.f32 %v1231, %v1955
    %v2020 = vsub.f32 %v1236, %v1956
    %v2021 = vsub.f32 %v1241, %v1957
    %v2022 = vmul.f32 %v1958, %v1958
    %v2023 = vmul.f32 %v1959, %v1959
    %v2024 = vmul.f32 %v1960, %v1960
    %v2025 = vmul.f32 %v1961, %v1961
    %v2026 = vmul.f32 %v1962, %v1962
    %v2027 = vmul.f32 %v1963, %v1963
    %v2028 = vmul.f32 %v1964, %v1964
    %v2029 = vmul.f32 %v1965, %v1965
    %v2030 = vmul.f32 %v1966, %v1966
    %v2031 = vmul.f32 %v1967, %v1967
    %v2032 = vmul.f32 %v1968, %v1968
    %v2033 = vmul.f32 %v1969, %v1969
    %v2034 = vmul.f32 %v1970, %v1970
    %v2035 = vmul.f32 %v1971, %v1971
    %v2036 = vmul.f32 %v1972, %v1972
    %v2037 = vmul.f32 %v1973, %v1973
    %v2038 = vmul.f32 %v1974, %v1974
    %v2039 = vmul.f32 %v1975, %v1975
    %v2040 = vmul.f32 %v1976, %v1976
    %v2041 = vmul.f32 %v1977, %v1977
    %v2042 = vmul.f32 %v1978, %v1978
    %v2043 = vmul.f32 %v1979, %v1979
    %v2044 = vmul.f32 %v1980, %v1980
    %v2045 = vmul.f32 %v1981, %v1981
    %v2046 = vmul.f32 %v1982, %v1982
    %v2047 = vmul.f32 %v1983, %v1983
    %v2048 = vmul.f32 %v1984, %v1984
    %v2049 = vmul.f32 %v1985, %v1985
    %v2050 = vmul.f32 %v1986, %v1986
    %v2051 = vmul.f32 %v1987, %v1987
    %v2052 = vmul.f32 %v1988, %v1988
    %v2053 = vmul.f32 %v1989, %v1989
    %v2054 = vmul.f32 %v1990, %v1990
    %v2055 = vmul.f32 %v1991, %v1991
    %v2056 = vmul.f32 %v1992, %v1992
    %v2057 = vmul.f32 %v1993, %v1993
    %v2058 = vmul.f32 %v1994, %v1994
    %v2059 = vmul.f32 %v1995, %v1995
    %v2060 = vmul.f32 %v1996, %v1996
    %v2061 = vmul.f32 %v1997, %v1997
    %v2062 = vmul.f32 %v1998, %v1998
    %v2063 = vmul.f32 %v1999, %v1999
    %v2064 = vmul.f32 %v2000, %v2000
    %v2065 = vmul.f32 %v2001, %v2001
    %v2066 = vmul.f32 %v2002, %v2002
    %v2067 = vmul.f32 %v2003, %v2003
    %v2068 = vmul.f32 %v2004, %v2004
    %v2069 = vmul.f32 %v2005, %v2005
    %v2070 = vmul.f32 %v2006, %v2006
    %v2071 = vmul.f32 %v2007, %v2007
    %v2072 = vmul.f32 %v2008, %v2008
    %v2073 = vmul.f32 %v2009, %v2009
    %v2074 = vmul.f32 %v2010, %v2010
    %v2075 = vmul.f32 %v2011, %v2011
    %v2076 = vmul.f32 %v2012, %v2012
    %v2077 = vmul.f32 %v2013, %v2013
    %v2078 = vmul.f32 %v2014, %v2014
    %v2079 = vmul.f32 %v2015, %v2015
    %v2080 = vmul.f32 %v2016, %v2016
    %v2081 = vmul.f32 %v2017, %v2017
    %v2082 = vmul.f32 %v2018, %v2018
    %v2083 = vmul.f32 %v2019, %v2019
    %v2084 = vmul.f32 %v2020, %v2020
    %v2085 = vmul.f32 %v2021, %v2021
    %v2086 = vsel %vm1244, %v2022, 0.0
    %v2087 = vsel %vm1244, %v2026, 0.0
    %v2088 = vadd.f32 %v2086, %v2087
    %v2089 = vsel %vm1244, %v2030, 0.0
    %v2090 = vadd.f32 %v2088, %v2089
    %v2091 = vsel %vm1244, %v2034, 0.0
    %v2092 = vadd.f32 %v2090, %v2091
    %v2093 = vsel %vm1244, %v2038, 0.0
    %v2094 = vadd.f32 %v2092, %v2093
    %v2095 = vsel %vm1244, %v2042, 0.0
    %v2096 = vadd.f32 %v2094, %v2095
    %v2097 = vsel %vm1244, %v2046, 0.0
    %v2098 = vadd.f32 %v2096, %v2097
    %v2099 = vsel %vm1244, %v2050, 0.0
    %v2100 = vadd.f32 %v2098, %v2099
    %v2101 = vsel %vm1244, %v2054, 0.0
    %v2102 = vadd.f32 %v2100, %v2101
    %v2103 = vsel %vm1244, %v2058, 0.0
    %v2104 = vadd.f32 %v2102, %v2103
    %v2105 = vsel %vm1244, %v2062, 0.0
    %v2106 = vadd.f32 %v2104, %v2105
    %v2107 = vsel %vm1244, %v2066, 0.0
    %v2108 = vadd.f32 %v2106, %v2107
    %v2109 = vsel %vm1244, %v2070, 0.0
    %v2110 = vadd.f32 %v2108, %v2109
    %v2111 = vsel %vm1244, %v2074, 0.0
    %v2112 = vadd.f32 %v2110, %v2111
    %v2113 = vsel %vm1244, %v2078, 0.0
    %v2114 = vadd.f32 %v2112, %v2113
    %v2115 = vsel %vm1244, %v2082, 0.0
    %v2116 = vadd.f32 %v2114, %v2115
    %v2117 = vsel %vm1244, %v2023, 0.0
    %v2118 = vsel %vm1244, %v2027, 0.0
    %v2119 = vadd.f32 %v2117, %v2118
    %v2120 = vsel %vm1244, %v2031, 0.0
    %v2121 = vadd.f32 %v2119, %v2120
    %v2122 = vsel %vm1244, %v2035, 0.0
    %v2123 = vadd.f32 %v2121, %v2122
    %v2124 = vsel %vm1244, %v2039, 0.0
    %v2125 = vadd.f32 %v2123, %v2124
    %v2126 = vsel %vm1244, %v2043, 0.0
    %v2127 = vadd.f32 %v2125, %v2126
    %v2128 = vsel %vm1244, %v2047, 0.0
    %v2129 = vadd.f32 %v2127, %v2128
    %v2130 = vsel %vm1244, %v2051, 0.0
    %v2131 = vadd.f32 %v2129, %v2130
    %v2132 = vsel %vm1244, %v2055, 0.0
    %v2133 = vadd.f32 %v2131, %v2132
    %v2134 = vsel %vm1244, %v2059, 0.0
    %v2135 = vadd.f32 %v2133, %v2134
    %v2136 = vsel %vm1244, %v2063, 0.0
    %v2137 = vadd.f32 %v2135, %v2136
    %v2138 = vsel %vm1244, %v2067, 0.0
    %v2139 = vadd.f32 %v2137, %v2138
    %v2140 = vsel %vm1244, %v2071, 0.0
    %v2141 = vadd.f32 %v2139, %v2140
    %v2142 = vsel %vm1244, %v2075, 0.0
    %v2143 = vadd.f32 %v2141, %v2142
    %v2144 = vsel %vm1244, %v2079, 0.0
    %v2145 = vadd.f32 %v2143, %v2144
    %v2146 = vsel %vm1244, %v2083, 0.0
    %v2147 = vadd.f32 %v2145, %v2146
    %v2148 = vsel %vm1244, %v2024, 0.0
    %v2149 = vsel %vm1244, %v2028, 0.0
    %v2150 = vadd.f32 %v2148, %v2149
    %v2151 = vsel %vm1244, %v2032, 0.0
    %v2152 = vadd.f32 %v2150, %v2151
    %v2153 = vsel %vm1244, %v2036, 0.0
    %v2154 = vadd.f32 %v2152, %v2153
    %v2155 = vsel %vm1244, %v2040, 0.0
    %v2156 = vadd.f32 %v2154, %v2155
    %v2157 = vsel %vm1244, %v2044, 0.0
    %v2158 = vadd.f32 %v2156, %v2157
    %v2159 = vsel %vm1244, %v2048, 0.0
    %v2160 = vadd.f32 %v2158, %v2159
    %v2161 = vsel %vm1244, %v2052, 0.0
    %v2162 = vadd.f32 %v2160, %v2161
    %v2163 = vsel %vm1244, %v2056, 0.0
    %v2164 = vadd.f32 %v2162, %v2163
    %v2165 = vsel %vm1244, %v2060, 0.0
    %v2166 = vadd.f32 %v2164, %v2165
    %v2167 = vsel %vm1244, %v2064, 0.0
    %v2168 = vadd.f32 %v2166, %v2167
    %v2169 = vsel %vm1244, %v2068, 0.0
    %v2170 = vadd.f32 %v2168, %v2169
    %v2171 = vsel %vm1244, %v2072, 0.0
    %v2172 = vadd.f32 %v2170, %v2171
    %v2173 = vsel %vm1244, %v2076, 0.0
    %v2174 = vadd.f32 %v2172, %v2173
    %v2175 = vsel %vm1244, %v2080, 0.0
    %v2176 = vadd.f32 %v2174, %v2175
    %v2177 = vsel %vm1244, %v2084, 0.0
    %v2178 = vadd.f32 %v2176, %v2177
    %v2179 = vsel %vm1244, %v2025, 0.0
    %v2180 = vsel %vm1244, %v2029, 0.0
    %v2181 = vadd.f32 %v2179, %v2180
    %v2182 = vsel %vm1244, %v2033, 0.0
    %v2183 = vadd.f32 %v2181, %v2182
    %v2184 = vsel %vm1244, %v2037, 0.0
    %v2185 = vadd.f32 %v2183, %v2184
    %v2186 = vsel %vm1244, %v2041, 0.0
    %v2187 = vadd.f32 %v2185, %v2186
    %v2188 = vsel %vm1244, %v2045, 0.0
    %v2189 = vadd.f32 %v2187, %v2188
    %v2190 = vsel %vm1244, %v2049, 0.0
    %v2191 = vadd.f32 %v2189, %v2190
    %v2192 = vsel %vm1244, %v2053, 0.0
    %v2193 = vadd.f32 %v2191, %v2192
    %v2194 = vsel %vm1244, %v2057, 0.0
    %v2195 = vadd.f32 %v2193, %v2194
    %v2196 = vsel %vm1244, %v2061, 0.0
    %v2197 = vadd.f32 %v2195, %v2196
    %v2198 = vsel %vm1244, %v2065, 0.0
    %v2199 = vadd.f32 %v2197, %v2198
    %v2200 = vsel %vm1244, %v2069, 0.0
    %v2201 = vadd.f32 %v2199, %v2200
    %v2202 = vsel %vm1244, %v2073, 0.0
    %v2203 = vadd.f32 %v2201, %v2202
    %v2204 = vsel %vm1244, %v2077, 0.0
    %v2205 = vadd.f32 %v2203, %v2204
    %v2206 = vsel %vm1244, %v2081, 0.0
    %v2207 = vadd.f32 %v2205, %v2206
    %v2208 = vsel %vm1244, %v2085, 0.0
    %v2209 = vadd.f32 %v2207, %v2208
    %v2210 = vmul.f32 %v2116, %v1369
    %v2211 = vmul.f32 %v2147, %v1369
    %v2212 = vmul.f32 %v2178, %v1369
    %v2213 = vmul.f32 %v2209, %v1369
    %v2214 = vadd.f32 %v2210, 1e-05
    %v2215 = vadd.f32 %v2211, 1e-05
    %v2216 = vadd.f32 %v2212, 1e-05
    %v2217 = vadd.f32 %v2213, 1e-05
    %v2218 = vrsqrt.pop %v2214
    %v2219 = vrsqrt.pop %v2215
    %v2220 = vrsqrt.pop %v2216
    %v2221 = vrsqrt.pop %v2217
    %v2222 = vmul.f32 %v1958, %v2218
    %v2223 = vmul.f32 %v1959, %v2219
    %v2224 = vmul.f32 %v1960, %v2220
    %v2225 = vmul.f32 %v1961, %v2221
    %v2226 = vmul.f32 %v1962, %v2218
    %v2227 = vmul.f32 %v1963, %v2219
    %v2228 = vmul.f32 %v1964, %v2220
    %v2229 = vmul.f32 %v1965, %v2221
    %v2230 = vmul.f32 %v1966, %v2218
    %v2231 = vmul.f32 %v1967, %v2219
    %v2232 = vmul.f32 %v1968, %v2220
    %v2233 = vmul.f32 %v1969, %v2221
    %v2234 = vmul.f32 %v1970, %v2218
    %v2235 = vmul.f32 %v1971, %v2219
    %v2236 = vmul.f32 %v1972, %v2220
    %v2237 = vmul.f32 %v1973, %v2221
    %v2238 = vmul.f32 %v1974, %v2218
    %v2239 = vmul.f32 %v1975, %v2219
    %v2240 = vmul.f32 %v1976, %v2220
    %v2241 = vmul.f32 %v1977, %v2221
    %v2242 = vmul.f32 %v1978, %v2218
    %v2243 = vmul.f32 %v1979, %v2219
    %v2244 = vmul.f32 %v1980, %v2220
    %v2245 = vmul.f32 %v1981, %v2221
    %v2246 = vmul.f32 %v1982, %v2218
    %v2247 = vmul.f32 %v1983, %v2219
    %v2248 = vmul.f32 %v1984, %v2220
    %v2249 = vmul.f32 %v1985, %v2221
    %v2250 = vmul.f32 %v1986, %v2218
    %v2251 = vmul.f32 %v1987, %v2219
    %v2252 = vmul.f32 %v1988, %v2220
    %v2253 = vmul.f32 %v1989, %v2221
    %v2254 = vmul.f32 %v1990, %v2218
    %v2255 = vmul.f32 %v1991, %v2219
    %v2256 = vmul.f32 %v1992, %v2220
    %v2257 = vmul.f32 %v1993, %v2221
    %v2258 = vmul.f32 %v1994, %v2218
    %v2259 = vmul.f32 %v1995, %v2219
    %v2260 = vmul.f32 %v1996, %v2220
    %v2261 = vmul.f32 %v1997, %v2221
    %v2262 = vmul.f32 %v1998, %v2218
    %v2263 = vmul.f32 %v1999, %v2219
    %v2264 = vmul.f32 %v2000, %v2220
    %v2265 = vmul.f32 %v2001, %v2221
    %v2266 = vmul.f32 %v2002, %v2218
    %v2267 = vmul.f32 %v2003, %v2219
    %v2268 = vmul.f32 %v2004, %v2220
    %v2269 = vmul.f32 %v2005, %v2221
    %v2270 = vmul.f32 %v2006, %v2218
    %v2271 = vmul.f32 %v2007, %v2219
    %v2272 = vmul.f32 %v2008, %v2220
    %v2273 = vmul.f32 %v2009, %v2221
    %v2274 = vmul.f32 %v2010, %v2218
    %v2275 = vmul.f32 %v2011, %v2219
    %v2276 = vmul.f32 %v2012, %v2220
    %v2277 = vmul.f32 %v2013, %v2221
    %v2278 = vmul.f32 %v2014, %v2218
    %v2279 = vmul.f32 %v2015, %v2219
    %v2280 = vmul.f32 %v2016, %v2220
    %v2281 = vmul.f32 %v2017, %v2221
    %v2282 = vmul.f32 %v2018, %v2218
    %v2283 = vmul.f32 %v2019, %v2219
    %v2284 = vmul.f32 %v2020, %v2220
    %v2285 = vmul.f32 %v2021, %v2221
    %v2286 = vmul.f32 %v2222, 0.1
    %v2287 = vmul.f32 %v2223, 0.1
    %v2288 = vmul.f32 %v2224, 0.1
    %v2289 = vmul.f32 %v2225, 0.1
    %v2290 = vmul.f32 %v2226, 0.1
    %v2291 = vmul.f32 %v2227, 0.1
    %v2292 = vmul.f32 %v2228, 0.1
    %v2293 = vmul.f32 %v2229, 0.1
    %v2294 = vmul.f32 %v2230, 0.1
    %v2295 = vmul.f32 %v2231, 0.1
    %v2296 = vmul.f32 %v2232, 0.1
    %v2297 = vmul.f32 %v2233, 0.1
    %v2298 = vmul.f32 %v2234, 0.1
    %v2299 = vmul.f32 %v2235, 0.1
    %v2300 = vmul.f32 %v2236, 0.1
    %v2301 = vmul.f32 %v2237, 0.1
    %v2302 = vmul.f32 %v2238, 0.1
    %v2303 = vmul.f32 %v2239, 0.1
    %v2304 = vmul.f32 %v2240, 0.1
    %v2305 = vmul.f32 %v2241, 0.1
    %v2306 = vmul.f32 %v2242, 0.1
    %v2307 = vmul.f32 %v2243, 0.1
    %v2308 = vmul.f32 %v2244, 0.1
    %v2309 = vmul.f32 %v2245, 0.1
    %v2310 = vmul.f32 %v2246, 0.1
    %v2311 = vmul.f32 %v2247, 0.1
    %v2312 = vmul.f32 %v2248, 0.1
    %v2313 = vmul.f32 %v2249, 0.1
    %v2314 = vmul.f32 %v2250, 0.1
    %v2315 = vmul.f32 %v2251, 0.1
    %v2316 = vmul.f32 %v2252, 0.1
    %v2317 = vmul.f32 %v2253, 0.1
    %v2318 = vmul.f32 %v2254, 0.1
    %v2319 = vmul.f32 %v2255, 0.1
    %v2320 = vmul.f32 %v2256, 0.1
    %v2321 = vmul.f32 %v2257, 0.1
    %v2322 = vmul.f32 %v2258, 0.1
    %v2323 = vmul.f32 %v2259, 0.1
    %v2324 = vmul.f32 %v2260, 0.1
    %v2325 = vmul.f32 %v2261, 0.1
    %v2326 = vmul.f32 %v2262, 0.1
    %v2327 = vmul.f32 %v2263, 0.1
    %v2328 = vmul.f32 %v2264, 0.1
    %v2329 = vmul.f32 %v2265, 0.1
    %v2330 = vmul.f32 %v2266, 0.1
    %v2331 = vmul.f32 %v2267, 0.1
    %v2332 = vmul.f32 %v2268, 0.1
    %v2333 = vmul.f32 %v2269, 0.1
    %v2334 = vmul.f32 %v2270, 0.1
    %v2335 = vmul.f32 %v2271, 0.1
    %v2336 = vmul.f32 %v2272, 0.1
    %v2337 = vmul.f32 %v2273, 0.1
    %v2338 = vmul.f32 %v2274, 0.1
    %v2339 = vmul.f32 %v2275, 0.1
    %v2340 = vmul.f32 %v2276, 0.1
    %v2341 = vmul.f32 %v2277, 0.1
    %v2342 = vmul.f32 %v2278, 0.1
    %v2343 = vmul.f32 %v2279, 0.1
    %v2344 = vmul.f32 %v2280, 0.1
    %v2345 = vmul.f32 %v2281, 0.1
    %v2346 = vmul.f32 %v2282, 0.1
    %v2347 = vmul.f32 %v2283, 0.1
    %v2348 = vmul.f32 %v2284, 0.1
    %v2349 = vmul.f32 %v2285, 0.1
    %v2350 = vmax.f32 %v2222, %v2286
    %v2351 = vmax.f32 %v2223, %v2287
    %v2352 = vmax.f32 %v2224, %v2288
    %v2353 = vmax.f32 %v2225, %v2289
    %v2354 = vmax.f32 %v2226, %v2290
    %v2355 = vmax.f32 %v2227, %v2291
    %v2356 = vmax.f32 %v2228, %v2292
    %v2357 = vmax.f32 %v2229, %v2293
    %v2358 = vmax.f32 %v2230, %v2294
    %v2359 = vmax.f32 %v2231, %v2295
    %v2360 = vmax.f32 %v2232, %v2296
    %v2361 = vmax.f32 %v2233, %v2297
    %v2362 = vmax.f32 %v2234, %v2298
    %v2363 = vmax.f32 %v2235, %v2299
    %v2364 = vmax.f32 %v2236, %v2300
    %v2365 = vmax.f32 %v2237, %v2301
    %v2366 = vmax.f32 %v2238, %v2302
    %v2367 = vmax.f32 %v2239, %v2303
    %v2368 = vmax.f32 %v2240, %v2304
    %v2369 = vmax.f32 %v2241, %v2305
    %v2370 = vmax.f32 %v2242, %v2306
    %v2371 = vmax.f32 %v2243, %v2307
    %v2372 = vmax.f32 %v2244, %v2308
    %v2373 = vmax.f32 %v2245, %v2309
    %v2374 = vmax.f32 %v2246, %v2310
    %v2375 = vmax.f32 %v2247, %v2311
    %v2376 = vmax.f32 %v2248, %v2312
    %v2377 = vmax.f32 %v2249, %v2313
    %v2378 = vmax.f32 %v2250, %v2314
    %v2379 = vmax.f32 %v2251, %v2315
    %v2380 = vmax.f32 %v2252, %v2316
    %v2381 = vmax.f32 %v2253, %v2317
    %v2382 = vmax.f32 %v2254, %v2318
    %v2383 = vmax.f32 %v2255, %v2319
    %v2384 = vmax.f32 %v2256, %v2320
    %v2385 = vmax.f32 %v2257, %v2321
    %v2386 = vmax.f32 %v2258, %v2322
    %v2387 = vmax.f32 %v2259, %v2323
    %v2388 = vmax.f32 %v2260, %v2324
    %v2389 = vmax.f32 %v2261, %v2325
    %v2390 = vmax.f32 %v2262, %v2326
    %v2391 = vmax.f32 %v2263, %v2327
    %v2392 = vmax.f32 %v2264, %v2328
    %v2393 = vmax.f32 %v2265, %v2329
    %v2394 = vmax.f32 %v2266, %v2330
    %v2395 = vmax.f32 %v2267, %v2331
    %v2396 = vmax.f32 %v2268, %v2332
    %v2397 = vmax.f32 %v2269, %v2333
    %v2398 = vmax.f32 %v2270, %v2334
    %v2399 = vmax.f32 %v2271, %v2335
    %v2400 = vmax.f32 %v2272, %v2336
    %v2401 = vmax.f32 %v2273, %v2337
    %v2402 = vmax.f32 %v2274, %v2338
    %v2403 = vmax.f32 %v2275, %v2339
    %v2404 = vmax.f32 %v2276, %v2340
    %v2405 = vmax.f32 %v2277, %v2341
    %v2406 = vmax.f32 %v2278, %v2342
    %v2407 = vmax.f32 %v2279, %v2343
    %v2408 = vmax.f32 %v2280, %v2344
    %v2409 = vmax.f32 %v2281, %v2345
    %v2410 = vmax.f32 %v2282, %v2346
    %v2411 = vmax.f32 %v2283, %v2347
    %v2412 = vmax.f32 %v2284, %v2348
    %v2413 = vmax.f32 %v2285, %v2349
    %v2414 = vadd.f32 %v1766, %v2350
    %v2415 = vadd.f32 %v1767, %v2351
    %v2416 = vadd.f32 %v1768, %v2352
    %v2417 = vadd.f32 %v1769, %v2353
    %v2418 = vadd.f32 %v1770, %v2354
    %v2419 = vadd.f32 %v1771, %v2355
    %v2420 = vadd.f32 %v1772, %v2356
    %v2421 = vadd.f32 %v1773, %v2357
    %v2422 = vadd.f32 %v1774, %v2358
    %v2423 = vadd.f32 %v1775, %v2359
    %v2424 = vadd.f32 %v1776, %v2360
    %v2425 = vadd.f32 %v1777, %v2361
    %v2426 = vadd.f32 %v1778, %v2362
    %v2427 = vadd.f32 %v1779, %v2363
    %v2428 = vadd.f32 %v1780, %v2364
    %v2429 = vadd.f32 %v1781, %v2365
    %v2430 = vadd.f32 %v1782, %v2366
    %v2431 = vadd.f32 %v1783, %v2367
    %v2432 = vadd.f32 %v1784, %v2368
    %v2433 = vadd.f32 %v1785, %v2369
    %v2434 = vadd.f32 %v1786, %v2370
    %v2435 = vadd.f32 %v1787, %v2371
    %v2436 = vadd.f32 %v1788, %v2372
    %v2437 = vadd.f32 %v1789, %v2373
    %v2438 = vadd.f32 %v1790, %v2374
    %v2439 = vadd.f32 %v1791, %v2375
    %v2440 = vadd.f32 %v1792, %v2376
    %v2441 = vadd.f32 %v1793, %v2377
    %v2442 = vadd.f32 %v1794, %v2378
    %v2443 = vadd.f32 %v1795, %v2379
    %v2444 = vadd.f32 %v1796, %v2380
    %v2445 = vadd.f32 %v1797, %v2381
    %v2446 = vadd.f32 %v1798, %v2382
    %v2447 = vadd.f32 %v1799, %v2383
    %v2448 = vadd.f32 %v1800, %v2384
    %v2449 = vadd.f32 %v1801, %v2385
    %v2450 = vadd.f32 %v1802, %v2386
    %v2451 = vadd.f32 %v1803, %v2387
    %v2452 = vadd.f32 %v1804, %v2388
    %v2453 = vadd.f32 %v1805, %v2389
    %v2454 = vadd.f32 %v1806, %v2390
    %v2455 = vadd.f32 %v1807, %v2391
    %v2456 = vadd.f32 %v1808, %v2392
    %v2457 = vadd.f32 %v1809, %v2393
    %v2458 = vadd.f32 %v1810, %v2394
    %v2459 = vadd.f32 %v1811, %v2395
    %v2460 = vadd.f32 %v1812, %v2396
    %v2461 = vadd.f32 %v1813, %v2397
    %v2462 = vadd.f32 %v1814, %v2398
    %v2463 = vadd.f32 %v1815, %v2399
    %v2464 = vadd.f32 %v1816, %v2400
    %v2465 = vadd.f32 %v1817, %v2401
    %v2466 = vadd.f32 %v1818, %v2402
    %v2467 = vadd.f32 %v1819, %v2403
    %v2468 = vadd.f32 %v1820, %v2404
    %v2469 = vadd.f32 %v1821, %v2405
    %v2470 = vadd.f32 %v1822, %v2406
    %v2471 = vadd.f32 %v1823, %v2407
    %v2472 = vadd.f32 %v1824, %v2408
    %v2473 = vadd.f32 %v1825, %v2409
    %v2474 = vadd.f32 %v1826, %v2410
    %v2475 = vadd.f32 %v1827, %v2411
    %v2476 = vadd.f32 %v1828, %v2412
    %v2477 = vadd.f32 %v1829, %v2413
    %v2478 = vmul.f32 %v2414, 0.1
    %v2479 = vmul.f32 %v2415, 0.1
    %v2480 = vmul.f32 %v2416, 0.1
    %v2481 = vmul.f32 %v2417, 0.1
    %v2482 = vmul.f32 %v2418, 0.1
    %v2483 = vmul.f32 %v2419, 0.1
    %v2484 = vmul.f32 %v2420, 0.1
    %v2485 = vmul.f32 %v2421, 0.1
    %v2486 = vmul.f32 %v2422, 0.1
    %v2487 = vmul.f32 %v2423, 0.1
    %v2488 = vmul.f32 %v2424, 0.1
    %v2489 = vmul.f32 %v2425, 0.1
    %v2490 = vmul.f32 %v2426, 0.1
    %v2491 = vmul.f32 %v2427, 0.1
    %v2492 = vmul.f32 %v2428, 0.1
    %v2493 = vmul.f32 %v2429, 0.1
    %v2494 = vmul.f32 %v2430, 0.1
    %v2495 = vmul.f32 %v2431, 0.1
    %v2496 = vmul.f32 %v2432, 0.1
    %v2497 = vmul.f32 %v2433, 0.1
    %v2498 = vmul.f32 %v2434, 0.1
    %v2499 = vmul.f32 %v2435, 0.1
    %v2500 = vmul.f32 %v2436, 0.1
    %v2501 = vmul.f32 %v2437, 0.1
    %v2502 = vmul.f32 %v2438, 0.1
    %v2503 = vmul.f32 %v2439, 0.1
    %v2504 = vmul.f32 %v2440, 0.1
    %v2505 = vmul.f32 %v2441, 0.1
    %v2506 = vmul.f32 %v2442, 0.1
    %v2507 = vmul.f32 %v2443, 0.1
    %v2508 = vmul.f32 %v2444, 0.1
    %v2509 = vmul.f32 %v2445, 0.1
    %v2510 = vmul.f32 %v2446, 0.1
    %v2511 = vmul.f32 %v2447, 0.1
    %v2512 = vmul.f32 %v2448, 0.1
    %v2513 = vmul.f32 %v2449, 0.1
    %v2514 = vmul.f32 %v2450, 0.1
    %v2515 = vmul.f32 %v2451, 0.1
    %v2516 = vmul.f32 %v2452, 0.1
    %v2517 = vmul.f32 %v2453, 0.1
    %v2518 = vmul.f32 %v2454, 0.1
    %v2519 = vmul.f32 %v2455, 0.1
    %v2520 = vmul.f32 %v2456, 0.1
    %v2521 = vmul.f32 %v2457, 0.1
    %v2522 = vmul.f32 %v2458, 0.1
    %v2523 = vmul.f32 %v2459, 0.1
    %v2524 = vmul.f32 %v2460, 0.1
    %v2525 = vmul.f32 %v2461, 0.1
    %v2526 = vmul.f32 %v2462, 0.1
    %v2527 = vmul.f32 %v2463, 0.1
    %v2528 = vmul.f32 %v2464, 0.1
    %v2529 = vmul.f32 %v2465, 0.1
    %v2530 = vmul.f32 %v2466, 0.1
    %v2531 = vmul.f32 %v2467, 0.1
    %v2532 = vmul.f32 %v2468, 0.1
    %v2533 = vmul.f32 %v2469, 0.1
    %v2534 = vmul.f32 %v2470, 0.1
    %v2535 = vmul.f32 %v2471, 0.1
    %v2536 = vmul.f32 %v2472, 0.1
    %v2537 = vmul.f32 %v2473, 0.1
    %v2538 = vmul.f32 %v2474, 0.1
    %v2539 = vmul.f32 %v2475, 0.1
    %v2540 = vmul.f32 %v2476, 0.1
    %v2541 = vmul.f32 %v2477, 0.1
    %v2542 = vmax.f32 %v2414, %v2478
    %v2543 = vmax.f32 %v2415, %v2479
    %v2544 = vmax.f32 %v2416, %v2480
    %v2545 = vmax.f32 %v2417, %v2481
    %v2546 = vmax.f32 %v2418, %v2482
    %v2547 = vmax.f32 %v2419, %v2483
    %v2548 = vmax.f32 %v2420, %v2484
    %v2549 = vmax.f32 %v2421, %v2485
    %v2550 = vmax.f32 %v2422, %v2486
    %v2551 = vmax.f32 %v2423, %v2487
    %v2552 = vmax.f32 %v2424, %v2488
    %v2553 = vmax.f32 %v2425, %v2489
    %v2554 = vmax.f32 %v2426, %v2490
    %v2555 = vmax.f32 %v2427, %v2491
    %v2556 = vmax.f32 %v2428, %v2492
    %v2557 = vmax.f32 %v2429, %v2493
    %v2558 = vmax.f32 %v2430, %v2494
    %v2559 = vmax.f32 %v2431, %v2495
    %v2560 = vmax.f32 %v2432, %v2496
    %v2561 = vmax.f32 %v2433, %v2497
    %v2562 = vmax.f32 %v2434, %v2498
    %v2563 = vmax.f32 %v2435, %v2499
    %v2564 = vmax.f32 %v2436, %v2500
    %v2565 = vmax.f32 %v2437, %v2501
    %v2566 = vmax.f32 %v2438, %v2502
    %v2567 = vmax.f32 %v2439, %v2503
    %v2568 = vmax.f32 %v2440, %v2504
    %v2569 = vmax.f32 %v2441, %v2505
    %v2570 = vmax.f32 %v2442, %v2506
    %v2571 = vmax.f32 %v2443, %v2507
    %v2572 = vmax.f32 %v2444, %v2508
    %v2573 = vmax.f32 %v2445, %v2509
    %v2574 = vmax.f32 %v2446, %v2510
    %v2575 = vmax.f32 %v2447, %v2511
    %v2576 = vmax.f32 %v2448, %v2512
    %v2577 = vmax.f32 %v2449, %v2513
    %v2578 = vmax.f32 %v2450, %v2514
    %v2579 = vmax.f32 %v2451, %v2515
    %v2580 = vmax.f32 %v2452, %v2516
    %v2581 = vmax.f32 %v2453, %v2517
    %v2582 = vmax.f32 %v2454, %v2518
    %v2583 = vmax.f32 %v2455, %v2519
    %v2584 = vmax.f32 %v2456, %v2520
    %v2585 = vmax.f32 %v2457, %v2521
    %v2586 = vmax.f32 %v2458, %v2522
    %v2587 = vmax.f32 %v2459, %v2523
    %v2588 = vmax.f32 %v2460, %v2524
    %v2589 = vmax.f32 %v2461, %v2525
    %v2590 = vmax.f32 %v2462, %v2526
    %v2591 = vmax.f32 %v2463, %v2527
    %v2592 = vmax.f32 %v2464, %v2528
    %v2593 = vmax.f32 %v2465, %v2529
    %v2594 = vmax.f32 %v2466, %v2530
    %v2595 = vmax.f32 %v2467, %v2531
    %v2596 = vmax.f32 %v2468, %v2532
    %v2597 = vmax.f32 %v2469, %v2533
    %v2598 = vmax.f32 %v2470, %v2534
    %v2599 = vmax.f32 %v2471, %v2535
    %v2600 = vmax.f32 %v2472, %v2536
    %v2601 = vmax.f32 %v2473, %v2537
    %v2602 = vmax.f32 %v2474, %v2538
    %v2603 = vmax.f32 %v2475, %v2539
    %v2604 = vmax.f32 %v2476, %v2540
    %v2605 = vmax.f32 %v2477, %v2541
    %v2606 = vld [vmem:[%s2] sm:$0x77]
    %v2607 = vld [vmem:[%s2 + $0x8] sm:$0x77]
    %v2608 = vld [vmem:[%s3] sm:$0x7]
    %2610 = vset.pattern.permute.xlu0 0
    %2611 = vperm.xlu0 %2610, %v2608
    %v2612 = vpop.permute.xlu0 %2611
    %v2616 = vcombine.high %v2606, %v2606
    %v2617 = vcombine.high %v2607, %v2607
    %2620 = vmatprep.subr.mxu0 0.0
    %2621 = vmatpush1.msra.mxu0 %v2542
    %2622 = vmatprep.subr.mxu0 0.0
    %2623 = vmatpush1.msra.mxu0 %v2543
    %2624 = vmatprep.subr.mxu0 0.0
    %2625 = vmatpush1.msra.mxu0 %v2544
    %2626 = vmatprep.subr.mxu0 0.0
    %2627 = vmatpush1.msra.mxu0 %v2545
    %2628 = vmatprep.subr.mxu0 0.0
    %2629 = vmatpush1.msra.mxu0 %v2546
    %2630 = vmatprep.subr.mxu0 0.0
    %2631 = vmatpush1.msra.mxu0 %v2547
    %2632 = vmatprep.subr.mxu0 0.0
    %2633 = vmatpush1.msra.mxu0 %v2548
    %2634 = vmatprep.subr.mxu0 0.0
    %2635 = vmatpush1.msra.mxu0 %v2549
    %2636 = vmatprep.subr.mxu0 0.0
    %2637 = vmatpush1.msra.mxu0 %v2550
    %2638 = vmatprep.subr.mxu0 0.0
    %2639 = vmatpush1.msra.mxu0 %v2551
    %2640 = vmatprep.subr.mxu0 0.0
    %2641 = vmatpush1.msra.mxu0 %v2552
    %2642 = vmatprep.subr.mxu0 0.0
    %2643 = vmatpush1.msra.mxu0 %v2553
    %2644 = vmatprep.subr.mxu0 0.0
    %2645 = vmatpush1.msra.mxu0 %v2554
    %2646 = vmatprep.subr.mxu0 0.0
    %2647 = vmatpush1.msra.mxu0 %v2555
    %2648 = vmatprep.subr.mxu0 0.0
    %2649 = vmatpush1.msra.mxu0 %v2556
    %2650 = vmatprep.subr.mxu0 0.0
    %2651 = vmatpush1.msra.mxu0 %v2557
    %2652 = vmatprep.subr.mxu0 0.0
    %2653 = vmatpush1.msra.mxu0 %v2558
    %2654 = vmatprep.subr.mxu0 0.0
    %2655 = vmatpush1.msra.mxu0 %v2559
    %2656 = vmatprep.subr.mxu0 0.0
    %2657 = vmatpush1.msra.mxu0 %v2560
    %2658 = vmatprep.subr.mxu0 0.0
    %2659 = vmatpush1.msra.mxu0 %v2561
    %2660 = vmatprep.subr.mxu0 0.0
    %2661 = vmatpush1.msra.mxu0 %v2562
    %2662 = vmatprep.subr.mxu0 0.0
    %2663 = vmatpush1.msra.mxu0 %v2563
    %2664 = vmatprep.subr.mxu0 0.0
    %2665 = vmatpush1.msra.mxu0 %v2564
    %2666 = vmatprep.subr.mxu0 0.0
    %2667 = vmatpush1.msra.mxu0 %v2565
    %2668 = vmatprep.subr.mxu0 0.0
    %2669 = vmatpush1.msra.mxu0 %v2566
    %2670 = vmatprep.subr.mxu0 0.0
    %2671 = vmatpush1.msra.mxu0 %v2567
    %2672 = vmatprep.subr.mxu0 0.0
    %2673 = vmatpush1.msra.mxu0 %v2568
    %2674 = vmatprep.subr.mxu0 0.0
    %2675 = vmatpush1.msra.mxu0 %v2569
    %2676 = vmatprep.subr.mxu0 0.0
    %2677 = vmatpush1.msra.mxu0 %v2570
    %2678 = vmatprep.subr.mxu0 0.0
    %2679 = vmatpush1.msra.mxu0 %v2571
    %2680 = vmatprep.subr.mxu0 0.0
    %2681 = vmatpush1.msra.mxu0 %v2572
    %2682 = vmatprep.subr.mxu0 0.0
    %2683 = vmatpush1.msra.mxu0 %v2573
    %2684 = vmatprep.mubr.f32.mxu0 %v2616
    %2685 = vmatmul.mubr.f32.gmra.mrb[0].mxu0 %v2606
    %v2686 = vpop.f32.mrb[0].mxu0
    %v2687 = vadd.f32 %v2612, %v2686
    %v2688 = vpop.f32.mrb[0].mxu0
    %2689 = vdwg.mxu0
    %2690 = vmatprep.subr.mxu0 0.0
    %2691 = vmatpush1.msra.mxu0 %v2574
    %2692 = vmatprep.subr.mxu0 0.0
    %2693 = vmatpush1.msra.mxu0 %v2575
    %2694 = vmatprep.subr.mxu0 0.0
    %2695 = vmatpush1.msra.mxu0 %v2576
    %2696 = vmatprep.subr.mxu0 0.0
    %2697 = vmatpush1.msra.mxu0 %v2577
    %2698 = vmatprep.subr.mxu0 0.0
    %2699 = vmatpush1.msra.mxu0 %v2578
    %2700 = vmatprep.subr.mxu0 0.0
    %2701 = vmatpush1.msra.mxu0 %v2579
    %2702 = vmatprep.subr.mxu0 0.0
    %2703 = vmatpush1.msra.mxu0 %v2580
    %2704 = vmatprep.subr.mxu0 0.0
    %2705 = vmatpush1.msra.mxu0 %v2581
    %2706 = vmatprep.subr.mxu0 0.0
    %2707 = vmatpush1.msra.mxu0 %v2582
    %2708 = vmatprep.subr.mxu0 0.0
    %2709 = vmatpush1.msra.mxu0 %v2583
    %2710 = vmatprep.subr.mxu0 0.0
    %2711 = vmatpush1.msra.mxu0 %v2584
    %2712 = vmatprep.subr.mxu0 0.0
    %2713 = vmatpush1.msra.mxu0 %v2585
    %2714 = vmatprep.subr.mxu0 0.0
    %2715 = vmatpush1.msra.mxu0 %v2586
    %2716 = vmatprep.subr.mxu0 0.0
    %2717 = vmatpush1.msra.mxu0 %v2587
    %2718 = vmatprep.subr.mxu0 0.0
    %2719 = vmatpush1.msra.mxu0 %v2588
    %2720 = vmatprep.subr.mxu0 0.0
    %2721 = vmatpush1.msra.mxu0 %v2589
    %2722 = vmatprep.subr.mxu0 0.0
    %2723 = vmatpush1.msra.mxu0 %v2590
    %2724 = vmatprep.subr.mxu0 0.0
    %2725 = vmatpush1.msra.mxu0 %v2591
    %2726 = vmatprep.subr.mxu0 0.0
    %2727 = vmatpush1.msra.mxu0 %v2592
    %2728 = vmatprep.subr.mxu0 0.0
    %2729 = vmatpush1.msra.mxu0 %v2593
    %2730 = vmatprep.subr.mxu0 0.0
    %2731 = vmatpush1.msra.mxu0 %v2594
    %2732 = vmatprep.subr.mxu0 0.0
    %2733 = vmatpush1.msra.mxu0 %v2595
    %2734 = vmatprep.subr.mxu0 0.0
    %2735 = vmatpush1.msra.mxu0 %v2596
    %2736 = vmatprep.subr.mxu0 0.0
    %2737 = vmatpush1.msra.mxu0 %v2597
    %2738 = vmatprep.subr.mxu0 0.0
    %2739 = vmatpush1.msra.mxu0 %v2598
    %2740 = vmatprep.subr.mxu0 0.0
    %2741 = vmatpush1.msra.mxu0 %v2599
    %2742 = vmatprep.subr.mxu0 0.0
    %2743 = vmatpush1.msra.mxu0 %v2600
    %2744 = vmatprep.subr.mxu0 0.0
    %2745 = vmatpush1.msra.mxu0 %v2601
    %2746 = vmatprep.subr.mxu0 0.0
    %2747 = vmatpush1.msra.mxu0 %v2602
    %2748 = vmatprep.subr.mxu0 0.0
    %2749 = vmatpush1.msra.mxu0 %v2603
    %2750 = vmatprep.subr.mxu0 0.0
    %2751 = vmatpush1.msra.mxu0 %v2604
    %2752 = vmatprep.subr.mxu0 0.0
    %2753 = vmatpush1.msra.mxu0 %v2605
    %2754 = vmatprep.mubr.f32.mxu0 %v2617
    %2755 = vmatmul.mubr.f32.gmra.mrb[0].mxu0 %v2607
    %v2756 = vpop.f32.mrb[0].mxu0
    %v2757 = vadd.f32 %v2687, %v2756
    %v2758 = vpop.f32.mrb[0].mxu0
    %2759 = vdwg.mxu0
    %vm2760 = vcmask 59392
    %2761 = vst.msk [vmem:[#allocation2] sm:$0x7] %vm2760, %v2757
    // Predicated region
    $region18: #{tpu_custom_call.1} parent=1 // pred_check
      _
    $region19: #{tpu_custom_call.1} parent=1 // pred_check_branch
      %2763 = sbr.rel (0) target = $region21
    $region20: #{tpu_custom_call.1} parent=1 // pred_region
      %s2765 = ssub.s32 64, 64
      %2766 = vsyncadd [#allocation3], %s2765
      %s2768 = sshll.u32 [#allocation2], 4
      %s2769 = int_to_ptr.vmem [resolvable:$true] %s2768
      %2771 = dma.vmem_to_hbm [thread:$0]  %s2769, 64, %s4, [#allocation3]
    $region21: #{tpu_custom_call.1} parent=1 // pred_fallthru
      _
    // Predicated region
    $region22: #{tpu_custom_call.1} parent=1 // pred_check
      _
    $region23: #{tpu_custom_call.1} parent=1 // pred_check_branch
      %2773 = sbr.rel (0) target = $region25
    $region24: #{tpu_custom_call.1} parent=1 // pred_region
      %2774 = dma.done [#allocation3], 64
    $region25: #{tpu_custom_call.1} parent=1 // pred_fallthru
      _
    %2775 = vsyncpa [#allocation3], 1

</llo_original>
